<compile_context>
chip_gen: v7x
topology: tpu7x:2x2x1
jax: 0.10.0
libtpu: 0.0.40
codegen_flags: <defaults>
</compile_context>

<pallas_src>
import functools
import math

import jax
import jax.numpy as jnp
from jax.experimental import pallas as pl
from jax.experimental.pallas import tpu as pltpu


def _round_up(a, m):
    return (a + m - 1) // m * m


# -----------------------------------------------------------------------------
# Rotation-matrix construction (pure JAX glue; tiny 9x9 per (b,n), elementwise).
# Faithful port of the torch _get_rotation_matrix (branch conditions kept verbatim).
# -----------------------------------------------------------------------------
def _get_rotation_matrix(thetas, scales):
    """thetas, scales: (bs, g) -> rotation matrices (bs, g, 9, 9)."""
    bs, g = thetas.shape
    th = thetas.reshape(-1).astype(jnp.float32)
    sc = scales.reshape(-1).astype(jnp.float32)
    bsg = bs * g

    x = jnp.cos(th) * sc
    y = jnp.sin(th) * sc
    yp = -jnp.sin(th) * sc

    a = x - y
    b = x * y
    c = x + y
    d = a * c
    e = a + c
    ap = x - yp
    bp = x * yp
    cp = x + yp
    dp = ap * cp
    ep = ap + cp

    z = jnp.zeros((bsg,), jnp.float32)
    one = jnp.ones((bsg,), jnp.float32)

    def M(rows):
        # rows: 9 lists of 9 arrays of shape (bsg,) -> (9, 9, bsg)
        return jnp.stack([jnp.stack(r, axis=0) for r in rows], axis=0)

    pb1 = M([
        [a, 1 - a, z, z, z, z, z, z, z],
        [z, 1 - y, y, z, z, z, z, z, z],
        [z, z, a, z, z, 1 - a, z, z, z],
        [y, z, z, 1 - y, z, z, z, z, z],
        [z, z, z, z, one, z, z, z, z],
        [z, z, z, z, z, 1 - y, z, z, y],
        [z, z, z, 1 - a, z, z, a, z, z],
        [z, z, z, z, z, z, y, 1 - y, z],
        [z, z, z, z, z, z, z, 1 - a, a],
    ])
    pb2 = M([
        [a, 1 - a, z, z, z, z, z, z, z],
        [z, x - b, b, z, 1 - c + b, y - b, z, z, z],
        [z, z, a, z, z, 1 - a, z, z, z],
        [b, y - b, z, x - b, 1 - c + b, z, z, z, z],
        [z, z, z, z, one, z, z, z, z],
        [z, z, z, z, 1 - c + b, x - b, z, y - b, b],
        [z, z, z, 1 - a, z, z, a, z, z],
        [z, z, z, y - b, 1 - c + b, z, b, x - b, z],
        [z, z, z, z, z, z, z, 1 - a, a],
    ])
    ps1 = M([
        [d, a - d, z, c - d, 1 - e + d, z, z, z, z],
        [z, x - b, b, z, 1 - c + b, y - b, z, z, z],
        [z, c - d, d, z, 1 - e + d, a - d, z, z, z],
        [b, y - b, z, x - b, 1 - c + b, z, z, z, z],
        [z, z, z, z, one, z, z, z, z],
        [z, z, z, z, 1 - c + b, x - b, z, y - b, b],
        [z, z, z, a - d, 1 - e + d, z, d, c - d, z],
        [z, z, z, y - b, 1 - c + b, z, b, x - b, z],
        [z, z, z, z, 1 - e + d, c - d, z, a - d, d],
    ])
    ps2 = pb2  # identical construction in the reference code
    nb1 = M([
        [cp, z, z, 1 - cp, z, z, z, z, z],
        [yp, 1 - yp, z, z, z, z, z, z, z],
        [z, 1 - cp, cp, z, z, z, z, z, z],
        [z, z, z, 1 - yp, z, z, yp, z, z],
        [z, z, z, z, one, z, z, z, z],
        [z, z, yp, z, z, 1 - yp, z, z, z],
        [z, z, z, z, z, z, cp, 1 - cp, z],
        [z, z, z, z, z, z, z, 1 - yp, yp],
        [z, z, z, z, z, 1 - cp, z, z, cp],
    ])
    nb2 = M([
        [cp, z, z, 1 - cp, z, z, z, z, z],
        [bp, x - bp, z, yp - bp, 1 - cp + bp, z, z, z, z],
        [z, 1 - cp, cp, z, z, z, z, z, z],
        [z, z, z, x - bp, 1 - cp + bp, z, bp, yp - bp, z],
        [z, z, z, z, one, z, z, z, z],
        [z, yp - bp, bp, z, 1 - cp + bp, x - bp, z, z, z],
        [z, z, z, z, z, z, cp, 1 - cp, z],
        [z, z, z, z, 1 - cp + bp, yp - bp, z, x - bp, bp],
        [z, z, z, z, z, 1 - cp, z, z, cp],
    ])
    ns1 = M([
        [dp, cp - dp, z, ap - dp, 1 - ep + dp, z, z, z, z],
        [bp, x - bp, z, yp - bp, 1 - cp + bp, z, z, z, z],
        [z, ap - dp, dp, z, 1 - ep + dp, cp - dp, z, z, z],
        [z, yp - bp, bp, z, 1 - cp + bp, x - bp, z, z, z],
        [z, z, z, z, one, z, z, z, z],
        [z, z, z, x - bp, 1 - cp + bp, z, bp, yp - bp, z],
        [z, z, z, cp - dp, 1 - ep + dp, z, dp, ap - dp, z],
        [z, z, z, z, 1 - cp + bp, yp - bp, z, x - bp, bp],
        [z, z, z, z, 1 - ep + dp, ap - dp, z, cp - dp, dp],
    ])
    ns2 = nb2  # identical construction in the reference code

    m_tp = (th >= 0).astype(jnp.float32)
    m_tn = (th < 0).astype(jnp.float32)
    m_sb = (sc >= 1).astype(jnp.float32)
    m_ss = (sc < 1).astype(jnp.float32)
    m_pb = m_tp * m_sb
    m_ps = m_tp * m_ss
    m_nb = m_tn * m_sb
    m_ns = m_tn * m_ss

    t_pb = m_pb * th
    t_ps = m_ps * th
    t_nb = m_nb * th
    t_ns = m_ns * th
    thr_pb = 1.0 / jnp.cos(t_pb)
    thr_ps = 1.0 / (jnp.cos(t_ps) + jnp.sin(t_ps))
    thr_nb = 1.0 / jnp.cos(-t_nb)
    thr_ns = 1.0 / (jnp.cos(t_ns) - jnp.sin(t_ns))

    m_pb1 = (t_pb >= thr_pb).astype(jnp.float32) * m_pb
    m_pb2 = (t_pb < thr_pb).astype(jnp.float32) * m_pb
    m_ps1 = (t_ps < thr_ps).astype(jnp.float32) * m_ps
    m_ps2 = (t_ps >= thr_ps).astype(jnp.float32) * m_ps
    m_nb1 = (t_nb >= thr_nb).astype(jnp.float32) * m_nb
    m_nb2 = (t_nb < thr_nb).astype(jnp.float32) * m_nb
    m_ns1 = (t_ns < thr_ns).astype(jnp.float32) * m_ns
    m_ns2 = (t_ns >= thr_ns).astype(jnp.float32) * m_ns

    rot = (m_pb1 * pb1 + m_pb2 * pb2 + m_ps1 * ps1 + m_ps2 * ps2
           + m_nb1 * nb1 + m_nb2 * nb2 + m_ns1 * ns1 + m_ns2 * ns2)  # (9, 9, bsg)

    rot = jnp.transpose(rot, (2, 0, 1)).reshape(bs, g, 9, 9)
    return rot


# -----------------------------------------------------------------------------
# Pallas kernel 1: weight-rotation matmul  (b*9, n*9) @ (n*9, Cout*Cin)
#   - M padded to a sublane multiple, N padded/tiled over the grid (parallel axis),
#     so the output block stays resident in VMEM for arbitrary Cout*Cin.
# -----------------------------------------------------------------------------
def _rot_mm_kernel(rm_ref, w_ref, o_ref):
    o_ref[...] = jnp.dot(rm_ref[...], w_ref[...],
                         preferred_element_type=jnp.float32)


def _pallas_rot_mm(rm, w):
    """(M, K) @ (K, N) in f32 (weights kept full precision; FLOPs are negligible)."""
    M, K = rm.shape
    N = w.shape[1]
    Mp = _round_up(M, 8)
    Np = _round_up(N, 128)
    tn = 512 if Np % 512 == 0 else (256 if Np % 256 == 0 else 128)

    rm_p = jnp.pad(rm.astype(jnp.float32), ((0, Mp - M), (0, 0)))
    w_p = jnp.pad(w.astype(jnp.float32), ((0, 0), (0, Np - N)))

    out = pl.pallas_call(
        _rot_mm_kernel,
        out_shape=jax.ShapeDtypeStruct((Mp, Np), jnp.float32),
        grid=(Np // tn,),
        in_specs=[
            pl.BlockSpec((Mp, K), lambda j: (0, 0)),
            pl.BlockSpec((K, tn), lambda j: (0, j)),
        ],
        out_specs=pl.BlockSpec((Mp, tn), lambda j: (0, j)),
        compiler_params=pltpu.CompilerParams(
            dimension_semantics=("parallel",)),
    )(rm_p, w_p)
    return out[:M, :N]


def batch_rotate_multiweight(weights, lambdas, thetas, scales):
    """Torch-compatible layout: (n,Cout,Cin,3,3) -> (b*Cout, Cin, 3, 3). Used for the
    reference path; the forward uses _rotate_weights_taps (no double transpose)."""
    b, n = thetas.shape
    _, Cout, Cin, _, _ = weights.shape
    rot = _get_rotation_matrix(thetas, scales) * lambdas[:, :, None, None]   # (b,n,9,9)
    rot = jnp.transpose(rot, (0, 2, 1, 3)).reshape(b * 9, n * 9)
    w = jnp.transpose(weights, (0, 3, 4, 1, 2)).reshape(n * 9, Cout * Cin)
    ww = _pallas_rot_mm(rot, w).reshape(b, 3, 3, Cout, Cin)
    ww = jnp.transpose(ww, (0, 3, 4, 1, 2))
    return ww.reshape(b * Cout, Cin, 3, 3)


def _rotate_weights_taps(weights, lambdas, thetas, scales):
    """Same math, emitted directly in the conv kernel's layout: (b, Cout, 9*Cin),
    column index = (ky*3+kx)*Cin + cin (single small transpose, no round trip)."""
    b, n = thetas.shape
    _, Cout, Cin, _, _ = weights.shape
    rot = _get_rotation_matrix(thetas, scales) * lambdas[:, :, None, None]
    rot = jnp.transpose(rot, (0, 2, 1, 3)).reshape(b * 9, n * 9)
    w = jnp.transpose(weights, (0, 3, 4, 1, 2)).reshape(n * 9, Cout * Cin)
    ww = _pallas_rot_mm(rot, w).reshape(b, 9, Cout, Cin)
    return jnp.transpose(ww, (0, 2, 1, 3)).reshape(b, Cout, 9 * Cin)


# -----------------------------------------------------------------------------
# Pallas kernel 2: per-sample 3x3 "same" conv (grouped-conv hot path)
#   One fused MXU matmul per (sample, row-tile):
#     out_tile (Cout, th*W) = W (Cout, 9*Cin)  x  patches^T (9*Cin, th*W)
#   patches is an im2col VMEM scratch built from 9 shifted slices of the padded
#   NHWC image (which stays resident in VMEM across the row-tile axis).
# -----------------------------------------------------------------------------
def _conv3x3_kernel(x_ref, w_ref, o_ref, patch_ref, *, W, Cin, th):
    # x_ref    : (H+2, W+2, Cin)  bf16   padded NHWC image (block index ignores j)
    # w_ref    : (Cout, 9*Cin)    bf16   per-sample weights, col = (ky*3+kx)*Cin + c
    # o_ref    : (Cout, th*W)     f32    lane-dense output row tile (spatial on lanes)
    # patch_ref: (th*W, 9*Cin)    bf16   im2col scratch -> fused K = 9*Cin contraction
    row0 = pl.multiple_of(pl.program_id(1) * th, th)
    for ky in range(3):
        for kx in range(3):
            tap = ky * 3 + kx
            xs = x_ref[pl.ds(row0 + ky, th), pl.ds(kx, W), :]        # (th, W, Cin)
            patch_ref[:, tap * Cin:(tap + 1) * Cin] = xs.reshape(th * W, Cin)
    o_ref[...] = jax.lax.dot_general(
        w_ref[...], patch_ref[...],
        dimension_numbers=(((1,), (1,)), ((), ())),                  # A @ B^T on the MXU
        preferred_element_type=jnp.float32,
    ).astype(o_ref.dtype)


def _pick_row_tile(H, W, Cin, slab_budget_bytes=6 * 1024 * 1024):
    """Largest th with th | H, th % 8 == 0 and (th*W) % 128 == 0 whose im2col slab
    fits the VMEM budget; prefer >= 2 row tiles (feeds both v7x TensorCores)."""
    cands = [t for t in range(8, H + 1, 8) if H % t == 0 and (t * W) % 128 == 0]
    if not cands:
        return H  # whole-image block (full-dim block shapes are always legal)
    fitting = [t for t in cands if 9 * Cin * t * W * 2 <= slab_budget_bytes]
    pool = fitting if fitting else [cands[0]]
    multi = [t for t in pool if H // t >= 2]
    pool = multi if multi else pool
    return max(pool)


def _pallas_per_sample_conv(x_nchw, w_taps_f32):
    """x_nchw: (B, Cin, H, W) f32; w_taps_f32: (B, Cout, 9*Cin) f32 -> (B, Cout, H, W)."""
    B, Cin, H, W = x_nchw.shape
    Cout = w_taps_f32.shape[1]
    th = _pick_row_tile(H, W, Cin)
    n_th = H // th

    # NCHW -> padded NHWC (one fused XLA transpose+pad), bf16 MXU operands.
    # TODO(synk): fuse this pad/transpose into the kernel (read NCHW + in-kernel halo).
    x_pad = jnp.pad(jnp.transpose(x_nchw, (0, 2, 3, 1)).astype(jnp.bfloat16),
                    ((0, 0), (1, 1), (1, 1), (0, 0)))                # (B, H+2, W+2, Cin)
    w_taps = w_taps_f32.astype(jnp.bfloat16)                         # (B, Cout, 9*Cin)

    kernel = functools.partial(_conv3x3_kernel, W=W, Cin=Cin, th=th)
    out = pl.pallas_call(
        kernel,
        out_shape=jax.ShapeDtypeStruct((B, Cout, H * W), jnp.float32),
        grid=(B, n_th),
        in_specs=[
            pl.BlockSpec((None, H + 2, W + 2, Cin), lambda b, j: (b, 0, 0, 0)),
            pl.BlockSpec((None, Cout, 9 * Cin), lambda b, j: (b, 0, 0)),
        ],
        out_specs=pl.BlockSpec((None, Cout, th * W), lambda b, j: (b, 0, j)),
        scratch_shapes=[pltpu.VMEM((th * W, 9 * Cin), jnp.bfloat16)],
        compiler_params=pltpu.CompilerParams(
            dimension_semantics=("parallel", "parallel"),
            vmem_limit_bytes=64 * 1024 * 1024,
        ),
    )(x_pad, w_taps)
    # (B, Cout, H*W) -> (B, Cout, H, W): contiguous split of the last axis (free reshape).
    return out.reshape(B, Cout, H, W)


# -----------------------------------------------------------------------------
# Module: params + forward
# -----------------------------------------------------------------------------
def init_params(key, in_channels, out_channels, kernel_size, kernel_number):
    k_w, k_a, k_t, k_s = jax.random.split(key, 4)
    # kaiming_normal_(mode='fan_out', relu) on (n, Cout, Cin, k, k):
    # torch's fan_out for >2D tensors = n * Cin * k * k
    fan_out = kernel_number * in_channels * kernel_size * kernel_size
    std = math.sqrt(2.0 / fan_out)
    weight = std * jax.random.normal(
        k_w, (kernel_number, out_channels, in_channels, kernel_size, kernel_size),
        dtype=jnp.float32)
    # TODO(synk): rounting_func is an external (None by default) submodule in the torch
    # code; we supply a deterministic GAP + linear routing head (alphas, angles, scales).
    routing = {
        "w_alpha": 0.5 * jax.random.normal(k_a, (in_channels, kernel_number), jnp.float32),
        "b_alpha": jnp.zeros((kernel_number,), jnp.float32),
        "w_theta": 0.5 * jax.random.normal(k_t, (in_channels, kernel_number), jnp.float32),
        "b_theta": jnp.zeros((kernel_number,), jnp.float32),
        "w_scale": 0.5 * jax.random.normal(k_s, (in_channels, kernel_number), jnp.float32),
        "b_scale": jnp.zeros((kernel_number,), jnp.float32),
    }
    return {"weight": weight, "routing": routing}


def routing_func(x, p):
    # x: (B, Cin, H, W) NCHW
    pooled = jnp.mean(x, axis=(2, 3))                                   # (B, Cin)
    alphas = jax.nn.softmax(pooled @ p["w_alpha"] + p["b_alpha"], -1)   # (B, n)
    angles = (jnp.pi / 4.0) * jnp.tanh(pooled @ p["w_theta"] + p["b_theta"])
    scales = 1.0 + 0.5 * jnp.tanh(pooled @ p["w_scale"] + p["b_scale"])
    return alphas, angles, scales


def adaptive_rotated_scaled_conv2d(params, x):
    """Forward pass. x: (B, Cin, H, W) NCHW -> (B, Cout, H, W)."""
    weight = params["weight"]                                 # (n, Cout, Cin, 3, 3)
    alphas, angles, scales = routing_func(x, params["routing"])
    w_taps = _rotate_weights_taps(weight, alphas, angles, scales)  # (B, Cout, 9*Cin)
    # grouped conv with groups=B == per-sample conv with per-sample weights
    return _pallas_per_sample_conv(x, w_taps)


# -----------------------------------------------------------------------------
if __name__ == "__main__":
    key = jax.random.PRNGKey(0)
    k_param, k_x = jax.random.split(key)

    B, Cin, Cout, H, W = 2, 4, 8, 16, 16
    kernel_number = 2

    params = init_params(k_param, Cin, Cout, kernel_size=3, kernel_number=kernel_number)
    x = jax.random.normal(k_x, (B, Cin, H, W), dtype=jnp.float32)

    out = jax.jit(adaptive_rotated_scaled_conv2d)(params, x)
    out = jax.block_until_ready(out)
    assert out.shape == (B, Cout, H, W), out.shape

    # Reference: lax grouped conv with the SAME rotated weights and the SAME bf16
    # operand quantization (cast bf16 -> f32), f32 accumulation.
    alphas, angles, scales = routing_func(x, params["routing"])
    rw = batch_rotate_multiweight(params["weight"], alphas, angles, scales)  # (B*Cout,Cin,3,3)
    x_q = x.astype(jnp.bfloat16).astype(jnp.float32)
    rw_q = rw.astype(jnp.bfloat16).astype(jnp.float32)
    ref = jax.lax.conv_general_dilated(
        x_q.reshape(1, B * Cin, H, W), rw_q,
        window_strides=(1, 1), padding=((1, 1), (1, 1)),
        dimension_numbers=("NCHW", "OIHW", "NCHW"),
        feature_group_count=B,
    ).reshape(B, Cout, H, W)
    assert jnp.allclose(out, ref, atol=2e-3, rtol=2e-3), float(jnp.max(jnp.abs(out - ref)))

    print("KERNEL_OK")
</pallas_src>

<mosaic_0001>
module attributes {stable_mosaic.version = 11 : i64} {
  func.func @_rot_mm_kernel(%arg0: i32, %arg1: memref<24x18xf32, #tpu.memory_space<vmem>>, %arg2: memref<18x128xf32, #tpu.memory_space<vmem>>, %arg3: memref<24x128xf32, #tpu.memory_space<vmem>>) attributes {dimension_semantics = [#tpu.dimension_semantics<parallel>], iteration_bounds = array<i64: 1>, scalar_prefetch = 0 : i64, scratch_operands = 0 : i64, tpu.core_type = #tpu.core_type<tc>, window_params = [{pipeline_mode = #tpu.pipeline_mode<synchronous>, transform_indices = @transform_0, window_bounds = array<i64: 24, 18>}, {transform_indices = @transform_1, window_bounds = array<i64: 18, 128>}, {transform_indices = @transform_2, window_bounds = array<i64: 24, 128>}]} {
    %c0 = arith.constant 0 : index
    %c0_0 = arith.constant 0 : index
    %0 = vector.load %arg1[%c0, %c0_0] : memref<24x18xf32, #tpu.memory_space<vmem>>, vector<24x18xf32>
    %c0_1 = arith.constant 0 : index
    %c0_2 = arith.constant 0 : index
    %1 = vector.load %arg2[%c0_1, %c0_2] : memref<18x128xf32, #tpu.memory_space<vmem>>, vector<18x128xf32>
    %cst = arith.constant dense<0.000000e+00> : vector<24x128xf32>
    %2 = tpu.matmul %0, %1, %cst {dimension_numbers = #tpu.dot_dimension_numbers<[1], [0], [0], [1], [0, 0, 1, 1], [], []>} : vector<24x18xf32>, vector<18x128xf32>, vector<24x128xf32> -> vector<24x128xf32>
    %c0_3 = arith.constant 0 : index
    %c0_4 = arith.constant 0 : index
    %3 = vector.load %arg3[%c0_3, %c0_4] : memref<24x128xf32, #tpu.memory_space<vmem>>, vector<24x128xf32>
    tpu.vector_store %arg3[%c0_3, %c0_4], %2 {strides = array<i32>} : memref<24x128xf32, #tpu.memory_space<vmem>>, vector<24x128xf32>,
    return
  }
  func.func @transform_0(%arg0: i32) -> (i32, i32) {
    %c0_i32 = arith.constant 0 : i32
    %c0_i32_0 = arith.constant 0 : i32
    %c0_i32_1 = arith.constant 0 : i32
    return %c0_i32, %c0_i32_0 : i32, i32
  }
  func.func @transform_1(%arg0: i32) -> (i32, i32) {
    %c0_i32 = arith.constant 0 : i32
    %c0_i32_0 = arith.constant 0 : i32
    return %c0_i32, %arg0 : i32, i32
  }
  func.func @transform_2(%arg0: i32) -> (i32, i32) {
    %c0_i32 = arith.constant 0 : i32
    %c0_i32_0 = arith.constant 0 : i32
    return %c0_i32, %arg0 : i32, i32
  }
}

module attributes {stable_mosaic.version = 11 : i64} {
  func.func @_conv3x3_kernel(%arg0: i32, %arg1: i32, %arg2: memref<1x18x18x4xbf16, #tpu.memory_space<vmem>>, %arg3: memref<1x8x36xbf16, #tpu.memory_space<vmem>>, %arg4: memref<1x8x128xf32, #tpu.memory_space<vmem>>, %arg5: memref<128x36xbf16, #tpu.memory_space<vmem>>) attributes {dimension_semantics = [#tpu.dimension_semantics<parallel>, #tpu.dimension_semantics<parallel>], iteration_bounds = array<i64: 2, 2>, scalar_prefetch = 0 : i64, scratch_operands = 1 : i64, tpu.core_type = #tpu.core_type<tc>, window_params = [{transform_indices = @transform_0, window_bounds = array<i64: 1, 18, 18, 4>}, {transform_indices = @transform_1, window_bounds = array<i64: 1, 8, 36>}, {transform_indices = @transform_2, window_bounds = array<i64: 1, 8, 128>}]} {
    %c8_i32 = arith.constant 8 : i32
    %0 = arith.muli %arg1, %c8_i32 : i32
    %1 = tpu.assume_multiple %0, 8 : i32
    %c0_i32 = arith.constant 0 : i32
    %2 = arith.addi %1, %c0_i32 : i32
    %c0 = arith.constant 0 : index
    %3 = arith.index_cast %2 : i32 to index
    %c0_0 = arith.constant 0 : index
    %c0_1 = arith.constant 0 : index
    %4 = vector.load %arg2[%c0, %3, %c0_0, %c0_1] : memref<1x18x18x4xbf16, #tpu.memory_space<vmem>>, vector<1x8x16x4xbf16>
    %5 = vector.shape_cast %4 : vector<1x8x16x4xbf16> to vector<8x16x4xbf16>
    %6 = vector.shape_cast %5 : vector<8x16x4xbf16> to vector<128x4xbf16>
    %c0_2 = arith.constant 0 : index
    %c0_3 = arith.constant 0 : index
    %7 = vector.load %arg5[%c0_2, %c0_3] : memref<128x36xbf16, #tpu.memory_space<vmem>>, vector<128x4xbf16>
    tpu.vector_store %arg5[%c0_2, %c0_3], %6 {strides = array<i32>} : memref<128x36xbf16, #tpu.memory_space<vmem>>, vector<128x4xbf16>,
    %c0_i32_4 = arith.constant 0 : i32
    %8 = arith.addi %1, %c0_i32_4 : i32
    %c0_5 = arith.constant 0 : index
    %9 = arith.index_cast %8 : i32 to index
    %c1 = arith.constant 1 : index
    %c0_6 = arith.constant 0 : index
    %10 = vector.load %arg2[%c0_5, %9, %c1, %c0_6] : memref<1x18x18x4xbf16, #tpu.memory_space<vmem>>, vector<1x8x16x4xbf16>
    %11 = vector.shape_cast %10 : vector<1x8x16x4xbf16> to vector<8x16x4xbf16>
    %12 = vector.shape_cast %11 : vector<8x16x4xbf16> to vector<128x4xbf16>
    %c0_7 = arith.constant 0 : index
    %c4 = arith.constant 4 : index
    %13 = vector.load %arg5[%c0_7, %c4] : memref<128x36xbf16, #tpu.memory_space<vmem>>, vector<128x4xbf16>
    tpu.vector_store %arg5[%c0_7, %c4], %12 {strides = array<i32>} : memref<128x36xbf16, #tpu.memory_space<vmem>>, vector<128x4xbf16>,
    %c0_i32_8 = arith.constant 0 : i32
    %14 = arith.addi %1, %c0_i32_8 : i32
    %c0_9 = arith.constant 0 : index
    %15 = arith.index_cast %14 : i32 to index
    %c2 = arith.constant 2 : index
    %c0_10 = arith.constant 0 : index
    %16 = vector.load %arg2[%c0_9, %15, %c2, %c0_10] : memref<1x18x18x4xbf16, #tpu.memory_space<vmem>>, vector<1x8x16x4xbf16>
    %17 = vector.shape_cast %16 : vector<1x8x16x4xbf16> to vector<8x16x4xbf16>
    %18 = vector.shape_cast %17 : vector<8x16x4xbf16> to vector<128x4xbf16>
    %c0_11 = arith.constant 0 : index
    %c8 = arith.constant 8 : index
    %19 = vector.load %arg5[%c0_11, %c8] : memref<128x36xbf16, #tpu.memory_space<vmem>>, vector<128x4xbf16>
    tpu.vector_store %arg5[%c0_11, %c8], %18 {strides = array<i32>} : memref<128x36xbf16, #tpu.memory_space<vmem>>, vector<128x4xbf16>,
    %c1_i32 = arith.constant 1 : i32
    %20 = arith.addi %1, %c1_i32 : i32
    %c0_12 = arith.constant 0 : index
    %21 = arith.index_cast %20 : i32 to index
    %c0_13 = arith.constant 0 : index
    %c0_14 = arith.constant 0 : index
    %22 = vector.load %arg2[%c0_12, %21, %c0_13, %c0_14] : memref<1x18x18x4xbf16, #tpu.memory_space<vmem>>, vector<1x8x16x4xbf16>
    %23 = vector.shape_cast %22 : vector<1x8x16x4xbf16> to vector<8x16x4xbf16>
    %24 = vector.shape_cast %23 : vector<8x16x4xbf16> to vector<128x4xbf16>
    %c0_15 = arith.constant 0 : index
    %c12 = arith.constant 12 : index
    %25 = vector.load %arg5[%c0_15, %c12] : memref<128x36xbf16, #tpu.memory_space<vmem>>, vector<128x4xbf16>
    tpu.vector_store %arg5[%c0_15, %c12], %24 {strides = array<i32>} : memref<128x36xbf16, #tpu.memory_space<vmem>>, vector<128x4xbf16>,
    %c1_i32_16 = arith.constant 1 : i32
    %26 = arith.addi %1, %c1_i32_16 : i32
    %c0_17 = arith.constant 0 : index
    %27 = arith.index_cast %26 : i32 to index
    %c1_18 = arith.constant 1 : index
    %c0_19 = arith.constant 0 : index
    %28 = vector.load %arg2[%c0_17, %27, %c1_18, %c0_19] : memref<1x18x18x4xbf16, #tpu.memory_space<vmem>>, vector<1x8x16x4xbf16>
    %29 = vector.shape_cast %28 : vector<1x8x16x4xbf16> to vector<8x16x4xbf16>
    %30 = vector.shape_cast %29 : vector<8x16x4xbf16> to vector<128x4xbf16>
    %c0_20 = arith.constant 0 : index
    %c16 = arith.constant 16 : index
    %31 = vector.load %arg5[%c0_20, %c16] : memref<128x36xbf16, #tpu.memory_space<vmem>>, vector<128x4xbf16>
    tpu.vector_store %arg5[%c0_20, %c16], %30 {strides = array<i32>} : memref<128x36xbf16, #tpu.memory_space<vmem>>, vector<128x4xbf16>,
    %c1_i32_21 = arith.constant 1 : i32
    %32 = arith.addi %1, %c1_i32_21 : i32
    %c0_22 = arith.constant 0 : index
    %33 = arith.index_cast %32 : i32 to index
    %c2_23 = arith.constant 2 : index
    %c0_24 = arith.constant 0 : index
    %34 = vector.load %arg2[%c0_22, %33, %c2_23, %c0_24] : memref<1x18x18x4xbf16, #tpu.memory_space<vmem>>, vector<1x8x16x4xbf16>
    %35 = vector.shape_cast %34 : vector<1x8x16x4xbf16> to vector<8x16x4xbf16>
    %36 = vector.shape_cast %35 : vector<8x16x4xbf16> to vector<128x4xbf16>
    %c0_25 = arith.constant 0 : index
    %c20 = arith.constant 20 : index
    %37 = vector.load %arg5[%c0_25, %c20] : memref<128x36xbf16, #tpu.memory_space<vmem>>, vector<128x4xbf16>
    tpu.vector_store %arg5[%c0_25, %c20], %36 {strides = array<i32>} : memref<128x36xbf16, #tpu.memory_space<vmem>>, vector<128x4xbf16>,
    %c2_i32 = arith.constant 2 : i32
    %38 = arith.addi %1, %c2_i32 : i32
    %c0_26 = arith.constant 0 : index
    %39 = arith.index_cast %38 : i32 to index
    %c0_27 = arith.constant 0 : index
    %c0_28 = arith.constant 0 : index
    %40 = vector.load %arg2[%c0_26, %39, %c0_27, %c0_28] : memref<1x18x18x4xbf16, #tpu.memory_space<vmem>>, vector<1x8x16x4xbf16>
    %41 = vector.shape_cast %40 : vector<1x8x16x4xbf16> to vector<8x16x4xbf16>
    %42 = vector.shape_cast %41 : vector<8x16x4xbf16> to vector<128x4xbf16>
    %c0_29 = arith.constant 0 : index
    %c24 = arith.constant 24 : index
    %43 = vector.load %arg5[%c0_29, %c24] : memref<128x36xbf16, #tpu.memory_space<vmem>>, vector<128x4xbf16>
    tpu.vector_store %arg5[%c0_29, %c24], %42 {strides = array<i32>} : memref<128x36xbf16, #tpu.memory_space<vmem>>, vector<128x4xbf16>,
    %c2_i32_30 = arith.constant 2 : i32
    %44 = arith.addi %1, %c2_i32_30 : i32
    %c0_31 = arith.constant 0 : index
    %45 = arith.index_cast %44 : i32 to index
    %c1_32 = arith.constant 1 : index
    %c0_33 = arith.constant 0 : index
    %46 = vector.load %arg2[%c0_31, %45, %c1_32, %c0_33] : memref<1x18x18x4xbf16, #tpu.memory_space<vmem>>, vector<1x8x16x4xbf16>
    %47 = vector.shape_cast %46 : vector<1x8x16x4xbf16> to vector<8x16x4xbf16>
    %48 = vector.shape_cast %47 : vector<8x16x4xbf16> to vector<128x4xbf16>
    %c0_34 = arith.constant 0 : index
    %c28 = arith.constant 28 : index
    %49 = vector.load %arg5[%c0_34, %c28] : memref<128x36xbf16, #tpu.memory_space<vmem>>, vector<128x4xbf16>
    tpu.vector_store %arg5[%c0_34, %c28], %48 {strides = array<i32>} : memref<128x36xbf16, #tpu.memory_space<vmem>>, vector<128x4xbf16>,
    %c2_i32_35 = arith.constant 2 : i32
    %50 = arith.addi %1, %c2_i32_35 : i32
    %c0_36 = arith.constant 0 : index
    %51 = arith.index_cast %50 : i32 to index
    %c2_37 = arith.constant 2 : index
    %c0_38 = arith.constant 0 : index
    %52 = vector.load %arg2[%c0_36, %51, %c2_37, %c0_38] : memref<1x18x18x4xbf16, #tpu.memory_space<vmem>>, vector<1x8x16x4xbf16>
    %53 = vector.shape_cast %52 : vector<1x8x16x4xbf16> to vector<8x16x4xbf16>
    %54 = vector.shape_cast %53 : vector<8x16x4xbf16> to vector<128x4xbf16>
    %c0_39 = arith.constant 0 : index
    %c32 = arith.constant 32 : index
    %55 = vector.load %arg5[%c0_39, %c32] : memref<128x36xbf16, #tpu.memory_space<vmem>>, vector<128x4xbf16>
    tpu.vector_store %arg5[%c0_39, %c32], %54 {strides = array<i32>} : memref<128x36xbf16, #tpu.memory_space<vmem>>, vector<128x4xbf16>,
    %c0_40 = arith.constant 0 : index
    %c0_41 = arith.constant 0 : index
    %c0_42 = arith.constant 0 : index
    %56 = vector.load %arg3[%c0_40, %c0_41, %c0_42] : memref<1x8x36xbf16, #tpu.memory_space<vmem>>, vector<1x8x36xbf16>
    %57 = vector.shape_cast %56 : vector<1x8x36xbf16> to vector<8x36xbf16>
    %c0_43 = arith.constant 0 : index
    %c0_44 = arith.constant 0 : index
    %58 = vector.load %arg5[%c0_43, %c0_44] : memref<128x36xbf16, #tpu.memory_space<vmem>>, vector<128x36xbf16>
    %cst = arith.constant dense<0.000000e+00> : vector<8x128xf32>
    %59 = tpu.matmul %57, %58, %cst {dimension_numbers = #tpu.dot_dimension_numbers<[1], [1], [0], [0], [0, 0, 1, 0], [], []>} : vector<8x36xbf16>, vector<128x36xbf16>, vector<8x128xf32> -> vector<8x128xf32>
    %c0_45 = arith.constant 0 : index
    %c0_46 = arith.constant 0 : index
    %c0_47 = arith.constant 0 : index
    %60 = vector.load %arg4[%c0_45, %c0_46, %c0_47] : memref<1x8x128xf32, #tpu.memory_space<vmem>>, vector<1x8x128xf32>
    %61 = vector.shape_cast %60 : vector<1x8x128xf32> to vector<8x128xf32>
    %62 = vector.shape_cast %59 : vector<8x128xf32> to vector<1x8x128xf32>
    tpu.vector_store %arg4[%c0_45, %c0_46, %c0_47], %62 {strides = array<i32>} : memref<1x8x128xf32, #tpu.memory_space<vmem>>, vector<1x8x128xf32>,
    return
  }
  func.func @transform_0(%arg0: i32, %arg1: i32) -> (i32, i32, i32, i32) {
    %c0_i32 = arith.constant 0 : i32
    %c0_i32_0 = arith.constant 0 : i32
    %c0_i32_1 = arith.constant 0 : i32
    %c0_i32_2 = arith.constant 0 : i32
    return %arg0, %c0_i32, %c0_i32_0, %c0_i32_1 : i32, i32, i32, i32
  }
  func.func @transform_1(%arg0: i32, %arg1: i32) -> (i32, i32, i32) {
    %c0_i32 = arith.constant 0 : i32
    %c0_i32_0 = arith.constant 0 : i32
    %c0_i32_1 = arith.constant 0 : i32
    return %arg0, %c0_i32, %c0_i32_0 : i32, i32, i32
  }
  func.func @transform_2(%arg0: i32, %arg1: i32) -> (i32, i32, i32) {
    %c0_i32 = arith.constant 0 : i32
    %c0_i32_0 = arith.constant 0 : i32
    return %arg0, %c0_i32, %arg1 : i32, i32, i32
  }
}

</mosaic_0001>

<llo_original>
// kernel: adaptive_rotated_scaled_conv2d.2
$region0: #{adaptive_rotated_scaled_conv2d.2}
  #allocation0 [shape = 'u32[]', space=smem, size = 0x4, offset = 0x4, fixed_abs, tag = 'smem constant byte address 0x4 - core index']
  #allocation1 [shape = 'u32[144,128]{1,0:T(1,128)}', space=vmem, size = 0x12000, scoped, tag = 'internal scratch']
  %s0 = inlined_call_operand.vmem [shape: f32[24,18], index: 0, kind: input, shape index: {}]
  %s1 = inlined_call_operand.vmem [shape: f32[18,128], index: 1, kind: input, shape index: {}]
  %s2 = inlined_call_operand.vmem [shape: f32[24,128], index: 2, kind: output, shape index: {}]
  %s3 = sld [smem:[#allocation0]]
  $region18: #{adaptive_rotated_scaled_conv2d.2} parent=0
    _
  %s5 = ssub.s32 1, %s3
  %s6 = scalar_select 0, %s5, %s3
  // Predicated region
  $region2: #{adaptive_rotated_scaled_conv2d.2} parent=0 // pred_check
    _
  $region3: #{adaptive_rotated_scaled_conv2d.2} parent=0 // pred_check_branch
    %8 = sbr.rel (0) target = $region5
  $region4: #{adaptive_rotated_scaled_conv2d.2} parent=0 // pred_region
    _
  $region5: #{adaptive_rotated_scaled_conv2d.2} parent=0 // pred_fallthru
    _
  // Predicated region
  $region6: #{adaptive_rotated_scaled_conv2d.2} parent=0 // pred_check
    _
  $region7: #{adaptive_rotated_scaled_conv2d.2} parent=0 // pred_check_branch
    %10 = sbr.rel (0) target = $region9
  $region8: #{adaptive_rotated_scaled_conv2d.2} parent=0 // pred_region
    _
  $region9: #{adaptive_rotated_scaled_conv2d.2} parent=0 // pred_fallthru
    _
  %v11 = vld [vmem:[%s0] sm:$0xff]
  %v12 = vld [vmem:[%s0 + $0x8] sm:$0xff]
  %v13 = vld [vmem:[%s0 + $0x10] sm:$0xff]
  %v14 = vld [vmem:[%s1] sm:$0xff]
  %v15 = vld [vmem:[%s1 + $0x8] sm:$0xff]
  %v16 = vld [vmem:[%s1 + $0x10] sm:$0x3]
  %vm17 = vcmask 146432
  %v19 = vsel %vm17, %v11, 0
  %v22 = vsel %vm17, %v12, 0
  %v25 = vsel %vm17, %v13, 0
  %vm27 = vcmask 1041408
  %v29 = vsel %vm27, %v16, 0
  %31 = vmatprep.subr.mxu0 0.0
  %32 = vmatpush1.msra.mxu0 %v14
  %33 = vmatprep.subr.mxu0 0.0
  %34 = vmatpush1.msra.mxu0 %v15
  %35 = vmatprep.subr.mxu0 0.0
  %36 = vmatpush1.msra.mxu0 %v29
  %37 = vmatprep.subr.mxu0 0.0
  %38 = vmatpush1.msra.mxu0 0.0
  %39 = vmatprep.subr.mxu0 0.0
  %40 = vmatpush1.msra.mxu0 0.0
  %41 = vmatprep.subr.mxu0 0.0
  %42 = vmatpush1.msra.mxu0 0.0
  %43 = vmatprep.subr.mxu0 0.0
  %44 = vmatpush1.msra.mxu0 0.0
  %45 = vmatprep.subr.mxu0 0.0
  %46 = vmatpush1.msra.mxu0 0.0
  %47 = vmatprep.subr.mxu0 0.0
  %48 = vmatpush1.msra.mxu0 0.0
  %49 = vmatprep.subr.mxu0 0.0
  %50 = vmatpush1.msra.mxu0 0.0
  %51 = vmatprep.subr.mxu0 0.0
  %52 = vmatpush1.msra.mxu0 0.0
  %53 = vmatprep.subr.mxu0 0.0
  %54 = vmatpush1.msra.mxu0 0.0
  %55 = vmatprep.subr.mxu0 0.0
  %56 = vmatpush1.msra.mxu0 0.0
  %57 = vmatprep.subr.mxu0 0.0
  %58 = vmatpush1.msra.mxu0 0.0
  %59 = vmatprep.subr.mxu0 0.0
  %60 = vmatpush1.msra.mxu0 0.0
  %61 = vmatprep.subr.mxu0 0.0
  %62 = vmatpush1.msra.mxu0 0.0
  %63 = vmatprep.subr.mxu0 0.0
  %64 = vmatpush1.msra.mxu0 0.0
  %65 = vmatprep.subr.mxu0 0.0
  %66 = vmatpush1.msra.mxu0 0.0
  %67 = vmatprep.subr.mxu0 0.0
  %68 = vmatpush1.msra.mxu0 0.0
  %69 = vmatprep.subr.mxu0 0.0
  %70 = vmatpush1.msra.mxu0 0.0
  %71 = vmatprep.subr.mxu0 0.0
  %72 = vmatpush1.msra.mxu0 0.0
  %73 = vmatprep.subr.mxu0 0.0
  %74 = vmatpush1.msra.mxu0 0.0
  %75 = vmatprep.subr.mxu0 0.0
  %76 = vmatpush1.msra.mxu0 0.0
  %77 = vmatprep.subr.mxu0 0.0
  %78 = vmatpush1.msra.mxu0 0.0
  %79 = vmatprep.subr.mxu0 0.0
  %80 = vmatpush1.msra.mxu0 0.0
  %81 = vmatprep.subr.mxu0 0.0
  %82 = vmatpush1.msra.mxu0 0.0
  %83 = vmatprep.subr.mxu0 0.0
  %84 = vmatpush1.msra.mxu0 0.0
  %85 = vmatprep.subr.mxu0 0.0
  %86 = vmatpush1.msra.mxu0 0.0
  %87 = vmatprep.subr.mxu0 0.0
  %88 = vmatpush1.msra.mxu0 0.0
  %89 = vmatprep.subr.mxu0 0.0
  %90 = vmatpush1.msra.mxu0 0.0
  %91 = vmatprep.subr.mxu0 0.0
  %92 = vmatpush1.msra.mxu0 0.0
  %93 = vmatprep.subr.mxu0 0.0
  %94 = vmatpush1.msra.mxu0 0.0
  %95 = vmatprep.mubr.f32.mxu0 0.0
  %96 = vmatmul.mubr.f32.gmra.mrb[0].mxu0 %v19
  %v97 = vpop.f32.mrb[0].mxu0
  %v98 = vadd.f32 0.0, %v97
  %v99 = vpop.f32.mrb[0].mxu0
  %100 = vmatprep.mubr.f32.mxu0 0.0
  %101 = vmatmul.mubr.f32.gmra.mrb[0].mxu0 %v22
  %v102 = vpop.f32.mrb[0].mxu0
  %v103 = vadd.f32 0.0, %v102
  %v104 = vpop.f32.mrb[0].mxu0
  %105 = vmatprep.mubr.f32.mxu0 0.0
  %106 = vmatmul.mubr.f32.gmra.mrb[0].mxu0 %v25
  %v107 = vpop.f32.mrb[0].mxu0
  %v108 = vadd.f32 0.0, %v107
  %v109 = vpop.f32.mrb[0].mxu0
  %110 = vdwg.mxu0
  %111 = vst [vmem:[%s2] sm:$0xff] %v98
  %112 = vst [vmem:[%s2 + $0x8] sm:$0xff] %v103
  %113 = vst [vmem:[%s2 + $0x10] sm:$0xff] %v108
  // Predicated region
  $region10: #{adaptive_rotated_scaled_conv2d.2} parent=0 // pred_check
    _
  $region11: #{adaptive_rotated_scaled_conv2d.2} parent=0 // pred_check_branch
    %115 = sbr.rel (0) target = $region13
  $region12: #{adaptive_rotated_scaled_conv2d.2} parent=0 // pred_region
    _
  $region13: #{adaptive_rotated_scaled_conv2d.2} parent=0 // pred_fallthru
    _
  // Predicated region
  $region14: #{adaptive_rotated_scaled_conv2d.2} parent=0 // pred_check
    _
  $region15: #{adaptive_rotated_scaled_conv2d.2} parent=0 // pred_check_branch
    %117 = sbr.rel (0) target = $region17
  $region16: #{adaptive_rotated_scaled_conv2d.2} parent=0 // pred_region
    _
  $region17: #{adaptive_rotated_scaled_conv2d.2} parent=0 // pred_fallthru
    _

// kernel: adaptive_rotated_scaled_conv2d.3
$region0: #{adaptive_rotated_scaled_conv2d.3}
  #allocation0 [shape = 'u32[]', space=smem, size = 0x4, offset = 0x4, fixed_abs, tag = 'smem constant byte address 0x4 - core index']
  #allocation1 [shape = 'u32[144,128]{1,0:T(1,128)}', space=vmem, size = 0x12000, scoped, tag = 'internal scratch']
  #allocation2 [shape = 'bf16[128,36]{1,0:T(16,128)(2,1)}', space=vmem, size = 0x8000, scoped, tag = 'scratch operand']
  %s0 = inlined_call_operand.hbm [shape: bf16[2,18,18,4], index: 0, kind: input, shape index: {}]
  %s1 = inlined_call_operand.hbm [shape: bf16[2,8,36], index: 1, kind: input, shape index: {}]
  %s2 = inlined_call_operand.hbm [shape: f32[2,8,256], index: 2, kind: output, shape index: {}]
  %s3 = sld [smem:[#allocation0]]
  $region49: #{adaptive_rotated_scaled_conv2d.3} parent=0
    _
  %s5 = ssub.s32 1, %s3
  %s6 = scalar_select 0, %s5, %s3
  $region1: #{adaptive_rotated_scaled_conv2d.3} parent=0
    #allocation3 [shape = 'u8[221184]{0}', space=vmem, size = 0x36000, scoped, tag = 'input window, operand 0']
    #allocation4 [shape = 's32[2]{0}', space=sflag, size = 0x8, scoped, tag = 'scoped memory for adaptive_rotated_scaled_conv2d.3']
    #allocation5 [shape = 's32[2]{0}', space=sflag, size = 0x8, scoped, tag = 'scoped memory for adaptive_rotated_scaled_conv2d.3']
    #allocation6 [shape = 'u8[4096]{0}', space=vmem, size = 0x1000, scoped, tag = 'input window, operand 1']
    #allocation7 [shape = 's32[2]{0}', space=sflag, size = 0x8, scoped, tag = 'scoped memory for adaptive_rotated_scaled_conv2d.3']
    #allocation8 [shape = 'u8[8192]{0}', space=vmem, size = 0x2000, scoped, tag = 'output window, operand 0']
    %7 = vsyncpa [#allocation4], 0
    %s8 = scalar_lea.sflag [#allocation4], 1
    %9 = vsyncpa %s8, 0
    %10 = vsyncpa [#allocation7], 0
    %s11 = scalar_lea.sflag [#allocation7], 1
    %12 = vsyncpa %s11, 0
    %13 = vsyncpa [#allocation5], 0
    %s14 = scalar_lea.sflag [#allocation5], 1
    %15 = vsyncpa %s14, 0
    loop: start=0, step=1, limit=6
    $region2: #{adaptive_rotated_scaled_conv2d.3} parent=1 // loop_pre_header
      _
    $region3: #{adaptive_rotated_scaled_conv2d.3} parent=1 // loop_header
      %s17 = sphi 0, %s21
      %p18 = scmp.ge.s32.totalorder %s17, 6
      %s24 = sphi 0, %s36
      %s25 = sphi 0, %s32
      %s26 = sphi 0, %s24
      %s27 = sphi 0, %s25
      %s28 = sphi 0, %s26
      %s29 = sphi 0, %s27
      %s39 = sphi 0, %s41
      %s42 = sphi 0, %s39
      %s43 = sphi 0, %s42
      %s59 = sphi 0, %s43
      %s65 = sphi 0, %s67
      %s68 = sphi 0, %s65
      %s69 = sphi 0, %s68
      %s85 = sphi 0, %s69
      %s93 = sphi 0, %s95
      %s96 = sphi 0, %s93
      %s97 = sphi 0, %s96
      %s113 = sphi 0, %s97
    $region4: #{adaptive_rotated_scaled_conv2d.3} parent=1 // loop_header_branch
      %20 = sbr.rel (%p18) target = $region8
    $region5: #{adaptive_rotated_scaled_conv2d.3} parent=1 // loop_body
      %s22 = ssub.s32 %s17, 1
      %s23 = ssub.s32 %s17, 2
      %s30 = sadd.s32 1, %s25
      %p31 = scmp.ge.s32.totalorder %s30, 2
      %s32 = scalar_select %p31, 0, %s30
      %s33 = sadd.s32 1, %s24
      %s34 = scalar_select %p31, %s33, %s24
      %p35 = scmp.ge.s32.totalorder %s34, 2
      %s36 = scalar_select %p35, 0, %s34
      %s37 = ssub.s32 %s24, %s36
      %p38 = scmp.eq.s32.totalorder %s37, 0
      %s40 = sadd.s32 %s39, 1
      %s41 = scalar_select %p38, %s39, %s40
      %p44 = pneg %p38
      %p45 = scmp.eq.s32.totalorder %s17, 3
      %p46 = por %p44, %p45
      %p47 = scmp.ne.s32.totalorder %s39, %s42
      %p48 = scmp.eq.s32.totalorder %s17, 0
      %p49 = por %p47, %p48
      %p50 = scmp.ne.s32.totalorder %s39, %s42
      %p51 = scmp.eq.s32.totalorder %s22, 3
      %p52 = por %p50, %p51
      %p53 = scmp.ne.s32.totalorder %s42, %s43
      %p54 = scmp.eq.s32.totalorder %s22, 0
      %p55 = por %p53, %p54
      %p56 = scmp.ne.s32.totalorder %s42, %s43
      %p57 = scmp.eq.s32.totalorder %s23, 3
      %p58 = por %p56, %p57
      %p60 = scmp.ne.s32.totalorder %s43, %s59
      %p61 = scmp.eq.s32.totalorder %s23, 0
      %p62 = por %p60, %p61
      %s63 = ssub.s32 %s24, %s36
      %p64 = scmp.eq.s32.totalorder %s63, 0
      %s66 = sadd.s32 %s65, 1
      %s67 = scalar_select %p64, %s65, %s66
      %p70 = pneg %p64
      %p71 = scmp.eq.s32.totalorder %s17, 3
      %p72 = por %p70, %p71
      %p73 = scmp.ne.s32.totalorder %s65, %s68
      %p74 = scmp.eq.s32.totalorder %s17, 0
      %p75 = por %p73, %p74
      %p76 = scmp.ne.s32.totalorder %s65, %s68
      %p77 = scmp.eq.s32.totalorder %s22, 3
      %p78 = por %p76, %p77
      %p79 = scmp.ne.s32.totalorder %s68, %s69
      %p80 = scmp.eq.s32.totalorder %s22, 0
      %p81 = por %p79, %p80
      %p82 = scmp.ne.s32.totalorder %s68, %s69
      %p83 = scmp.eq.s32.totalorder %s23, 3
      %p84 = por %p82, %p83
      %p86 = scmp.ne.s32.totalorder %s69, %s85
      %p87 = scmp.eq.s32.totalorder %s23, 0
      %p88 = por %p86, %p87
      %s89 = ssub.s32 %s24, %s36
      %s90 = ssub.s32 %s25, %s32
      %s91 = sor.u32 %s89, %s90
      %p92 = scmp.eq.s32.totalorder %s91, 0
      %s94 = sadd.s32 %s93, 1
      %s95 = scalar_select %p92, %s93, %s94
      %p98 = pneg %p92
      %p99 = scmp.eq.s32.totalorder %s17, 3
      %p100 = por %p98, %p99
      %p101 = scmp.ne.s32.totalorder %s93, %s96
      %p102 = scmp.eq.s32.totalorder %s17, 0
      %p103 = por %p101, %p102
      %p104 = scmp.ne.s32.totalorder %s93, %s96
      %p105 = scmp.eq.s32.totalorder %s22, 3
      %p106 = por %p104, %p105
      %p107 = scmp.ne.s32.totalorder %s96, %s97
      %p108 = scmp.eq.s32.totalorder %s22, 0
      %p109 = por %p107, %p108
      %p110 = scmp.ne.s32.totalorder %s96, %s97
      %p111 = scmp.eq.s32.totalorder %s23, 3
      %p112 = por %p110, %p111
      %p114 = scmp.ne.s32.totalorder %s97, %s113
      %p115 = scmp.eq.s32.totalorder %s23, 0
      %p116 = por %p114, %p115
      %p117 = scmp.le.s32.totalorder 1, %s17
      %p118 = scmp.lt.s32.totalorder %s17, 5
      %p119 = pnand %p117, %p118
      %p120 = pneg %p119
      // Predicated region
      $region9: #{adaptive_rotated_scaled_conv2d.3} parent=5 // pred_check
        _
      $region10: #{adaptive_rotated_scaled_conv2d.3} parent=5 // pred_check_branch
        %122 = sbr.rel (%p119) target = $region12
      $region11: #{adaptive_rotated_scaled_conv2d.3} parent=5 // pred_region
        %s123 = ssub.s32 %s17, 1
      $region12: #{adaptive_rotated_scaled_conv2d.3} parent=5 // pred_fallthru
        _
      %p124 = scmp.lt.s32.totalorder %s17, 4
      // Predicated region
      $region13: #{adaptive_rotated_scaled_conv2d.3} parent=5 // pred_check
        %p125 = pneg %p124
      $region14: #{adaptive_rotated_scaled_conv2d.3} parent=5 // pred_check_branch
        %127 = sbr.rel (%p125) target = $region16
      $region15: #{adaptive_rotated_scaled_conv2d.3} parent=5 // pred_region
        // Predicated region
        $region17: #{adaptive_rotated_scaled_conv2d.3} parent=15 // pred_check
          %p128 = pneg %p49
        $region18: #{adaptive_rotated_scaled_conv2d.3} parent=15 // pred_check_branch
          %130 = sbr.rel (%p128) target = $region20
        $region19: #{adaptive_rotated_scaled_conv2d.3} parent=15 // pred_region
          %s131 = sand.u32 %s39, 1
          %s132 = scalar_lea.sflag [#allocation4], %s131
          %s133 = sand.u32 %s39, 1
          %s134 = smul.addr %s133, 216
          %s135 = scalar_lea.vmem [#allocation3], %s134
          %s137 = ssub.s32 3456, 3456
          %138 = vsyncadd %s132, %s137
          %s139 = smul.addr %s24, 54
          %s140 = smul.addr %s139, 64
          %s141 = scalar_lea.hbm %s0, %s140
          %s142 = sshll.u32 %s135, 4
          %s143 = int_to_ptr.vmem [resolvable:$true] %s142
          %148 = dma.hbm_to_vmem [thread:$0]  %s141, 3456, %s143, %s132, 64, 64, 4
        $region20: #{adaptive_rotated_scaled_conv2d.3} parent=15 // pred_fallthru
          _
        // Predicated region
        $region21: #{adaptive_rotated_scaled_conv2d.3} parent=15 // pred_check
          %p149 = pneg %p75
        $region22: #{adaptive_rotated_scaled_conv2d.3} parent=15 // pred_check_branch
          %151 = sbr.rel (%p149) target = $region24
        $region23: #{adaptive_rotated_scaled_conv2d.3} parent=15 // pred_region
          %s152 = sand.u32 %s65, 1
          %s153 = scalar_lea.sflag [#allocation7], %s152
          %s154 = sand.u32 %s65, 1
          %s155 = smul.addr %s154, 4
          %s156 = scalar_lea.vmem [#allocation6], %s155
          %s158 = ssub.s32 64, 64
          %159 = vsyncadd %s153, %s158
          %s160 = smul.addr %s24, 64
          %s161 = scalar_lea.hbm %s1, %s160
          %s163 = sshll.u32 %s156, 4
          %s164 = int_to_ptr.vmem [resolvable:$true] %s163
          %166 = dma.hbm_to_vmem [thread:$0]  %s161, 64, %s164, %s153
        $region24: #{adaptive_rotated_scaled_conv2d.3} parent=15 // pred_fallthru
          _
      $region16: #{adaptive_rotated_scaled_conv2d.3} parent=5 // pred_fallthru
        _
      %p167 = scmp.le.s32.totalorder 1, %s17
      %p168 = scmp.lt.s32.totalorder %s17, 5
      %p169 = pnand %p167, %p168
      %p170 = pneg %p169
      // Predicated region
      $region25: #{adaptive_rotated_scaled_conv2d.3} parent=5 // pred_check
        _
      $region26: #{adaptive_rotated_scaled_conv2d.3} parent=5 // pred_check_branch
        %172 = sbr.rel (%p169) target = $region28
      $region27: #{adaptive_rotated_scaled_conv2d.3} parent=5 // pred_region
        %s173 = ssub.s32 %s17, 1
        %s174 = sand.u32 %s42, 1
        %s175 = scalar_lea.sflag [#allocation4], %s174
        %s176 = sand.u32 %s42, 1
        %s177 = smul.addr %s176, 216
        %s178 = scalar_lea.vmem [#allocation3], %s177
        // Predicated region
        $region29: #{adaptive_rotated_scaled_conv2d.3} parent=27 // pred_check
          %p179 = pneg %p55
        $region30: #{adaptive_rotated_scaled_conv2d.3} parent=27 // pred_check_branch
          %181 = sbr.rel (%p179) target = $region32
        $region31: #{adaptive_rotated_scaled_conv2d.3} parent=27 // pred_region
          %182 = dma.done %s175, 3456
        $region32: #{adaptive_rotated_scaled_conv2d.3} parent=27 // pred_fallthru
          _
        %s183 = sand.u32 %s68, 1
        %s184 = scalar_lea.sflag [#allocation7], %s183
        %s185 = sand.u32 %s68, 1
        %s186 = smul.addr %s185, 4
        %s187 = scalar_lea.vmem [#allocation6], %s186
        // Predicated region
        $region33: #{adaptive_rotated_scaled_conv2d.3} parent=27 // pred_check
          %p188 = pneg %p81
        $region34: #{adaptive_rotated_scaled_conv2d.3} parent=27 // pred_check_branch
          %190 = sbr.rel (%p188) target = $region36
        $region35: #{adaptive_rotated_scaled_conv2d.3} parent=27 // pred_region
          %191 = dma.done %s184, 64
        $region36: #{adaptive_rotated_scaled_conv2d.3} parent=27 // pred_fallthru
          _
        %s192 = sand.u32 %s42, 1
        %s193 = scalar_lea.sflag [#allocation4], %s192
        %s194 = sand.u32 %s42, 1
        %s195 = smul.addr %s194, 216
        %s196 = scalar_lea.vmem [#allocation3], %s195
        %p197 = pneg %p55
        %p198 = pneg %p52
        %s199 = sand.u32 %s68, 1
        %s200 = scalar_lea.sflag [#allocation7], %s199
        %s201 = sand.u32 %s68, 1
        %s202 = smul.addr %s201, 4
        %s203 = scalar_lea.vmem [#allocation6], %s202
        %p204 = pneg %p81
        %p205 = pneg %p78
        %p206 = pneg %p109
        %p207 = pneg %p106
        %s208 = sand.u32 %s96, 1
        %s209 = scalar_lea.sflag [#allocation5], %s208
        %s210 = sand.u32 %s96, 1
        %s211 = smul.addr %s210, 8
        %s212 = scalar_lea.vmem [#allocation8], %s211
        %s214 = smul.u32 %s27, 8
        %s215 = smul.u32 %s214, 3
        %s216 = smul.addr %s215, 4
        %s217 = scalar_lea.vmem %s178, %s216 [#allocation3]
        %v218 = vld [vmem:[%s217] sm:$0xf]
        %v219 = vld [vmem:[%s217 + $0x4] sm:$0xf]
        %v220 = vld [vmem:[%s217 + $0xc] sm:$0xf]
        %v221 = vld [vmem:[%s217 + $0x10] sm:$0xf]
        %v222 = vld [vmem:[%s217 + $0x18] sm:$0xf]
        %v223 = vld [vmem:[%s217 + $0x1c] sm:$0xf]
        %v224 = vld [vmem:[%s217 + $0x24] sm:$0xf]
        %v225 = vld [vmem:[%s217 + $0x28] sm:$0xf]
        %v226 = vld [vmem:[%s217 + $0x30] sm:$0xf]
        %v227 = vld [vmem:[%s217 + $0x34] sm:$0xf]
        %v228 = vld [vmem:[%s217 + $0x3c] sm:$0xf]
        %v229 = vld [vmem:[%s217 + $0x40] sm:$0xf]
        %v230 = vld [vmem:[%s217 + $0x48] sm:$0xf]
        %v231 = vld [vmem:[%s217 + $0x4c] sm:$0xf]
        %v232 = vld [vmem:[%s217 + $0x54] sm:$0xf]
        %v233 = vld [vmem:[%s217 + $0x58] sm:$0xf]
        %v250 = vunpack.c.l.b16 %v218
        %v251 = vunpack.c.l.b16 %v219
        %v252 = vunpack.c.l.b16 %v220
        %v253 = vunpack.c.l.b16 %v221
        %v254 = vunpack.c.l.b16 %v222
        %v255 = vunpack.c.l.b16 %v223
        %v256 = vunpack.c.l.b16 %v224
        %v257 = vunpack.c.l.b16 %v225
        %v258 = vunpack.c.l.b16 %v226
        %v259 = vunpack.c.l.b16 %v227
        %v260 = vunpack.c.l.b16 %v228
        %v261 = vunpack.c.l.b16 %v229
        %v262 = vunpack.c.l.b16 %v230
        %v263 = vunpack.c.l.b16 %v231
        %v264 = vunpack.c.l.b16 %v232
        %v265 = vunpack.c.l.b16 %v233
        %v266 = vpack.c.b16 %v251, %v250
        %v267 = vpack.c.b16 %v253, %v252
        %v268 = vpack.c.b16 %v255, %v254
        %v269 = vpack.c.b16 %v257, %v256
        %v270 = vpack.c.b16 %v259, %v258
        %v271 = vpack.c.b16 %v261, %v260
        %v272 = vpack.c.b16 %v263, %v262
        %v273 = vpack.c.b16 %v265, %v264
        %vm282 = vcmask 31744
        %283 = vst.msk [vmem:[#allocation2] sm:$0xff] %vm282, %v266
        %284 = vst.msk [vmem:[#allocation2 + $0x8] sm:$0xff] %vm282, %v267
        %285 = vst.msk [vmem:[#allocation2 + $0x10] sm:$0xff] %vm282, %v268
        %286 = vst.msk [vmem:[#allocation2 + $0x18] sm:$0xff] %vm282, %v269
        %287 = vst.msk [vmem:[#allocation2 + $0x20] sm:$0xff] %vm282, %v270
        %288 = vst.msk [vmem:[#allocation2 + $0x28] sm:$0xff] %vm282, %v271
        %289 = vst.msk [vmem:[#allocation2 + $0x30] sm:$0xff] %vm282, %v272
        %290 = vst.msk [vmem:[#allocation2 + $0x38] sm:$0xff] %vm282, %v273
        %v291 = vld [vmem:[%s217] sm:$0xf]
        %v292 = vld [vmem:[%s217 + $0x4] sm:$0xf]
        %v293 = vld [vmem:[%s217 + $0x8] sm:$0x1]
        %v294 = vld [vmem:[%s217 + $0xc] sm:$0xf]
        %v295 = vld [vmem:[%s217 + $0x10] sm:$0xf]
        %v296 = vld [vmem:[%s217 + $0x14] sm:$0x1]
        %v297 = vld [vmem:[%s217 + $0x18] sm:$0xf]
        %v298 = vld [vmem:[%s217 + $0x1c] sm:$0xf]
        %v299 = vld [vmem:[%s217 + $0x20] sm:$0x1]
        %v300 = vld [vmem:[%s217 + $0x24] sm:$0xf]
        %v301 = vld [vmem:[%s217 + $0x28] sm:$0xf]
        %v302 = vld [vmem:[%s217 + $0x2c] sm:$0x1]
        %v303 = vld [vmem:[%s217 + $0x30] sm:$0xf]
        %v304 = vld [vmem:[%s217 + $0x34] sm:$0xf]
        %v305 = vld [vmem:[%s217 + $0x38] sm:$0x1]
        %v306 = vld [vmem:[%s217 + $0x3c] sm:$0xf]
        %v307 = vld [vmem:[%s217 + $0x40] sm:$0xf]
        %v308 = vld [vmem:[%s217 + $0x44] sm:$0x1]
        %v309 = vld [vmem:[%s217 + $0x48] sm:$0xf]
        %v310 = vld [vmem:[%s217 + $0x4c] sm:$0xf]
        %v311 = vld [vmem:[%s217 + $0x50] sm:$0x1]
        %v312 = vld [vmem:[%s217 + $0x54] sm:$0xf]
        %v313 = vld [vmem:[%s217 + $0x58] sm:$0xf]
        %v314 = vld [vmem:[%s217 + $0x5c] sm:$0x1]
        %vm315 = vsmask.f32 3328
        %vm316 = vsmask.f32 7440
        %vm317 = vmor %vm315, %vm316
        %v319 = vshrl.u32 %v291, 16
        %v321 = vrot.slane %v319, 4
        %v322 = vshll.u32 %v291, 16
        %v324 = vrot.slane %v322, 5
        %v325 = vor.u32 %v321, %v324
        %v326 = vrot.slane %v325, 4
        %v328 = vshll.u32 %v292, 16
        %v330 = vrot.slane %v328, 5
        %v331 = vsel %vm317, %v326, %v330
        %v332 = vshrl.u32 %v292, 16
        %v334 = vrot.slane %v332, 4
        %v335 = vor.u32 %v334, %v330
        %v336 = vrot.slane %v335, 4
        %v338 = vshll.u32 %v293, 16
        %v340 = vrot.slane %v338, 5
        %v341 = vsel %vm317, %v336, %v340
        %v343 = vshrl.u32 %v294, 16
        %v345 = vrot.slane %v343, 4
        %v346 = vshll.u32 %v294, 16
        %v348 = vrot.slane %v346, 5
        %v349 = vor.u32 %v345, %v348
        %v350 = vrot.slane %v349, 4
        %v352 = vshll.u32 %v295, 16
        %v354 = vrot.slane %v352, 5
        %v355 = vsel %vm317, %v350, %v354
        %v356 = vshrl.u32 %v295, 16
        %v358 = vrot.slane %v356, 4
        %v359 = vor.u32 %v358, %v354
        %v360 = vrot.slane %v359, 4
        %v362 = vshll.u32 %v296, 16
        %v364 = vrot.slane %v362, 5
        %v365 = vsel %vm317, %v360, %v364
        %v367 = vshrl.u32 %v297, 16
        %v369 = vrot.slane %v367, 4
        %v370 = vshll.u32 %v297, 16
        %v372 = vrot.slane %v370, 5
        %v373 = vor.u32 %v369, %v372
        %v374 = vrot.slane %v373, 4
        %v376 = vshll.u32 %v298, 16
        %v378 = vrot.slane %v376, 5
        %v379 = vsel %vm317, %v374, %v378
        %v380 = vshrl.u32 %v298, 16
        %v382 = vrot.slane %v380, 4
        %v383 = vor.u32 %v382, %v378
        %v384 = vrot.slane %v383, 4
        %v386 = vshll.u32 %v299, 16
        %v388 = vrot.slane %v386, 5
        %v389 = vsel %vm317, %v384, %v388
        %v391 = vshrl.u32 %v300, 16
        %v393 = vrot.slane %v391, 4
        %v394 = vshll.u32 %v300, 16
        %v396 = vrot.slane %v394, 5
        %v397 = vor.u32 %v393, %v396
        %v398 = vrot.slane %v397, 4
        %v400 = vshll.u32 %v301, 16
        %v402 = vrot.slane %v400, 5
        %v403 = vsel %vm317, %v398, %v402
        %v404 = vshrl.u32 %v301, 16
        %v406 = vrot.slane %v404, 4
        %v407 = vor.u32 %v406, %v402
        %v408 = vrot.slane %v407, 4
        %v410 = vshll.u32 %v302, 16
        %v412 = vrot.slane %v410, 5
        %v413 = vsel %vm317, %v408, %v412
        %v415 = vshrl.u32 %v303, 16
        %v417 = vrot.slane %v415, 4
        %v418 = vshll.u32 %v303, 16
        %v420 = vrot.slane %v418, 5
        %v421 = vor.u32 %v417, %v420
        %v422 = vrot.slane %v421, 4
        %v424 = vshll.u32 %v304, 16
        %v426 = vrot.slane %v424, 5
        %v427 = vsel %vm317, %v422, %v426
        %v428 = vshrl.u32 %v304, 16
        %v430 = vrot.slane %v428, 4
        %v431 = vor.u32 %v430, %v426
        %v432 = vrot.slane %v431, 4
        %v434 = vshll.u32 %v305, 16
        %v436 = vrot.slane %v434, 5
        %v437 = vsel %vm317, %v432, %v436
        %v439 = vshrl.u32 %v306, 16
        %v441 = vrot.slane %v439, 4
        %v442 = vshll.u32 %v306, 16
        %v444 = vrot.slane %v442, 5
        %v445 = vor.u32 %v441, %v444
        %v446 = vrot.slane %v445, 4
        %v448 = vshll.u32 %v307, 16
        %v450 = vrot.slane %v448, 5
        %v451 = vsel %vm317, %v446, %v450
        %v452 = vshrl.u32 %v307, 16
        %v454 = vrot.slane %v452, 4
        %v455 = vor.u32 %v454, %v450
        %v456 = vrot.slane %v455, 4
        %v458 = vshll.u32 %v308, 16
        %v460 = vrot.slane %v458, 5
        %v461 = vsel %vm317, %v456, %v460
        %v463 = vshrl.u32 %v309, 16
        %v465 = vrot.slane %v463, 4
        %v466 = vshll.u32 %v309, 16
        %v468 = vrot.slane %v466, 5
        %v469 = vor.u32 %v465, %v468
        %v470 = vrot.slane %v469, 4
        %v472 = vshll.u32 %v310, 16
        %v474 = vrot.slane %v472, 5
        %v475 = vsel %vm317, %v470, %v474
        %v476 = vshrl.u32 %v310, 16
        %v478 = vrot.slane %v476, 4
        %v479 = vor.u32 %v478, %v474
        %v480 = vrot.slane %v479, 4
        %v482 = vshll.u32 %v311, 16
        %v484 = vrot.slane %v482, 5
        %v485 = vsel %vm317, %v480, %v484
        %v487 = vshrl.u32 %v312, 16
        %v489 = vrot.slane %v487, 4
        %v490 = vshll.u32 %v312, 16
        %v492 = vrot.slane %v490, 5
        %v493 = vor.u32 %v489, %v492
        %v494 = vrot.slane %v493, 4
        %v496 = vshll.u32 %v313, 16
        %v498 = vrot.slane %v496, 5
        %v499 = vsel %vm317, %v494, %v498
        %v500 = vshrl.u32 %v313, 16
        %v502 = vrot.slane %v500, 4
        %v503 = vor.u32 %v502, %v498
        %v504 = vrot.slane %v503, 4
        %v506 = vshll.u32 %v314, 16
        %v508 = vrot.slane %v506, 5
        %v509 = vsel %vm317, %v504, %v508
        %v510 = vunpack.c.l.b16 %v331
        %v511 = vunpack.c.l.b16 %v341
        %v512 = vunpack.c.l.b16 %v355
        %v513 = vunpack.c.l.b16 %v365
        %v514 = vunpack.c.l.b16 %v379
        %v515 = vunpack.c.l.b16 %v389
        %v516 = vunpack.c.l.b16 %v403
        %v517 = vunpack.c.l.b16 %v413
        %v518 = vunpack.c.l.b16 %v427
        %v519 = vunpack.c.l.b16 %v437
        %v520 = vunpack.c.l.b16 %v451
        %v521 = vunpack.c.l.b16 %v461
        %v522 = vunpack.c.l.b16 %v475
        %v523 = vunpack.c.l.b16 %v485
        %v524 = vunpack.c.l.b16 %v499
        %v525 = vunpack.c.l.b16 %v509
        %v526 = vpack.c.b16 %v511, %v510
        %v527 = vpack.c.b16 %v513, %v512
        %v528 = vpack.c.b16 %v515, %v514
        %v529 = vpack.c.b16 %v517, %v516
        %v530 = vpack.c.b16 %v519, %v518
        %v531 = vpack.c.b16 %v521, %v520
        %v532 = vpack.c.b16 %v523, %v522
        %v533 = vpack.c.b16 %v525, %v524
        %534 = vrot.lane.b32.xlu0 %v526, 4
        %v535 = vpop.permute.xlu0 %534
        %536 = vrot.lane.b32.xlu0 %v527, 4
        %v537 = vpop.permute.xlu0 %536
        %538 = vrot.lane.b32.xlu0 %v528, 4
        %v539 = vpop.permute.xlu0 %538
        %540 = vrot.lane.b32.xlu0 %v529, 4
        %v541 = vpop.permute.xlu0 %540
        %542 = vrot.lane.b32.xlu0 %v530, 4
        %v543 = vpop.permute.xlu0 %542
        %544 = vrot.lane.b32.xlu0 %v531, 4
        %v545 = vpop.permute.xlu0 %544
        %546 = vrot.lane.b32.xlu0 %v532, 4
        %v547 = vpop.permute.xlu0 %546
        %548 = vrot.lane.b32.xlu0 %v533, 4
        %v549 = vpop.permute.xlu0 %548
        %vm558 = vcmask 64544
        %559 = vst.msk [vmem:[#allocation2] sm:$0xff] %vm558, %v535
        %560 = vst.msk [vmem:[#allocation2 + $0x8] sm:$0xff] %vm558, %v537
        %561 = vst.msk [vmem:[#allocation2 + $0x10] sm:$0xff] %vm558, %v539
        %562 = vst.msk [vmem:[#allocation2 + $0x18] sm:$0xff] %vm558, %v541
        %563 = vst.msk [vmem:[#allocation2 + $0x20] sm:$0xff] %vm558, %v543
        %564 = vst.msk [vmem:[#allocation2 + $0x28] sm:$0xff] %vm558, %v545
        %565 = vst.msk [vmem:[#allocation2 + $0x30] sm:$0xff] %vm558, %v547
        %566 = vst.msk [vmem:[#allocation2 + $0x38] sm:$0xff] %vm558, %v549
        %v567 = vld [vmem:[%s217] sm:$0xe]
        %v568 = vld [vmem:[%s217 + $0x4] sm:$0xf]
        %v569 = vld [vmem:[%s217 + $0x8] sm:$0x1]
        %v570 = vld [vmem:[%s217 + $0xc] sm:$0xe]
        %v571 = vld [vmem:[%s217 + $0x10] sm:$0xf]
        %v572 = vld [vmem:[%s217 + $0x14] sm:$0x1]
        %v573 = vld [vmem:[%s217 + $0x18] sm:$0xe]
        %v574 = vld [vmem:[%s217 + $0x1c] sm:$0xf]
        %v575 = vld [vmem:[%s217 + $0x20] sm:$0x1]
        %v576 = vld [vmem:[%s217 + $0x24] sm:$0xe]
        %v577 = vld [vmem:[%s217 + $0x28] sm:$0xf]
        %v578 = vld [vmem:[%s217 + $0x2c] sm:$0x1]
        %v579 = vld [vmem:[%s217 + $0x30] sm:$0xe]
        %v580 = vld [vmem:[%s217 + $0x34] sm:$0xf]
        %v581 = vld [vmem:[%s217 + $0x38] sm:$0x1]
        %v582 = vld [vmem:[%s217 + $0x3c] sm:$0xe]
        %v583 = vld [vmem:[%s217 + $0x40] sm:$0xf]
        %v584 = vld [vmem:[%s217 + $0x44] sm:$0x1]
        %v585 = vld [vmem:[%s217 + $0x48] sm:$0xe]
        %v586 = vld [vmem:[%s217 + $0x4c] sm:$0xf]
        %v587 = vld [vmem:[%s217 + $0x50] sm:$0x1]
        %v588 = vld [vmem:[%s217 + $0x54] sm:$0xe]
        %v589 = vld [vmem:[%s217 + $0x58] sm:$0xf]
        %v590 = vld [vmem:[%s217 + $0x5c] sm:$0x1]
        %vm615 = vcmask 1042432
        %vm616 = vcmask 1046532
        %vm617 = vmor %vm615, %vm616
        %v618 = vrot.slane %v567, 5
        %v619 = vrot.slane %v618, 4
        %v620 = vrot.slane %v568, 5
        %v621 = vsel %vm617, %v619, %v620
        %v622 = vrot.slane %v620, 4
        %v623 = vrot.slane %v569, 5
        %v624 = vsel %vm617, %v622, %v623
        %v625 = vrot.slane %v570, 5
        %v626 = vrot.slane %v625, 4
        %v627 = vrot.slane %v571, 5
        %v628 = vsel %vm617, %v626, %v627
        %v629 = vrot.slane %v627, 4
        %v630 = vrot.slane %v572, 5
        %v631 = vsel %vm617, %v629, %v630
        %v632 = vrot.slane %v573, 5
        %v633 = vrot.slane %v632, 4
        %v634 = vrot.slane %v574, 5
        %v635 = vsel %vm617, %v633, %v634
        %v636 = vrot.slane %v634, 4
        %v637 = vrot.slane %v575, 5
        %v638 = vsel %vm617, %v636, %v637
        %v639 = vrot.slane %v576, 5
        %v640 = vrot.slane %v639, 4
        %v641 = vrot.slane %v577, 5
        %v642 = vsel %vm617, %v640, %v641
        %v643 = vrot.slane %v641, 4
        %v644 = vrot.slane %v578, 5
        %v645 = vsel %vm617, %v643, %v644
        %v646 = vrot.slane %v579, 5
        %v647 = vrot.slane %v646, 4
        %v648 = vrot.slane %v580, 5
        %v649 = vsel %vm617, %v647, %v648
        %v650 = vrot.slane %v648, 4
        %v651 = vrot.slane %v581, 5
        %v652 = vsel %vm617, %v650, %v651
        %v653 = vrot.slane %v582, 5
        %v654 = vrot.slane %v653, 4
        %v655 = vrot.slane %v583, 5
        %v656 = vsel %vm617, %v654, %v655
        %v657 = vrot.slane %v655, 4
        %v658 = vrot.slane %v584, 5
        %v659 = vsel %vm617, %v657, %v658
        %v660 = vrot.slane %v585, 5
        %v661 = vrot.slane %v660, 4
        %v662 = vrot.slane %v586, 5
        %v663 = vsel %vm617, %v661, %v662
        %v664 = vrot.slane %v662, 4
        %v665 = vrot.slane %v587, 5
        %v666 = vsel %vm617, %v664, %v665
        %v667 = vrot.slane %v588, 5
        %v668 = vrot.slane %v667, 4
        %v669 = vrot.slane %v589, 5
        %v670 = vsel %vm617, %v668, %v669
        %v671 = vrot.slane %v669, 4
        %v672 = vrot.slane %v590, 5
        %v673 = vsel %vm617, %v671, %v672
        %v674 = vunpack.c.l.b16 %v621
        %v675 = vunpack.c.l.b16 %v624
        %v676 = vunpack.c.l.b16 %v628
        %v677 = vunpack.c.l.b16 %v631
        %v678 = vunpack.c.l.b16 %v635
        %v679 = vunpack.c.l.b16 %v638
        %v680 = vunpack.c.l.b16 %v642
        %v681 = vunpack.c.l.b16 %v645
        %v682 = vunpack.c.l.b16 %v649
        %v683 = vunpack.c.l.b16 %v652
        %v684 = vunpack.c.l.b16 %v656
        %v685 = vunpack.c.l.b16 %v659
        %v686 = vunpack.c.l.b16 %v663
        %v687 = vunpack.c.l.b16 %v666
        %v688 = vunpack.c.l.b16 %v670
        %v689 = vunpack.c.l.b16 %v673
        %v690 = vpack.c.b16 %v675, %v674
        %v691 = vpack.c.b16 %v677, %v676
        %v692 = vpack.c.b16 %v679, %v678
        %v693 = vpack.c.b16 %v681, %v680
        %v694 = vpack.c.b16 %v683, %v682
        %v695 = vpack.c.b16 %v685, %v684
        %v696 = vpack.c.b16 %v687, %v686
        %v697 = vpack.c.b16 %v689, %v688
        %698 = vrot.lane.b32.xlu0 %v690, 8
        %v699 = vpop.permute.xlu0 %698
        %700 = vrot.lane.b32.xlu0 %v691, 8
        %v701 = vpop.permute.xlu0 %700
        %702 = vrot.lane.b32.xlu0 %v692, 8
        %v703 = vpop.permute.xlu0 %702
        %704 = vrot.lane.b32.xlu0 %v693, 8
        %v705 = vpop.permute.xlu0 %704
        %706 = vrot.lane.b32.xlu0 %v694, 8
        %v707 = vpop.permute.xlu0 %706
        %708 = vrot.lane.b32.xlu0 %v695, 8
        %v709 = vpop.permute.xlu0 %708
        %710 = vrot.lane.b32.xlu0 %v696, 8
        %v711 = vpop.permute.xlu0 %710
        %712 = vrot.lane.b32.xlu0 %v697, 8
        %v713 = vpop.permute.xlu0 %712
        %vm722 = vcmask 97344
        %723 = vst.msk [vmem:[#allocation2] sm:$0xff] %vm722, %v699
        %724 = vst.msk [vmem:[#allocation2 + $0x8] sm:$0xff] %vm722, %v701
        %725 = vst.msk [vmem:[#allocation2 + $0x10] sm:$0xff] %vm722, %v703
        %726 = vst.msk [vmem:[#allocation2 + $0x18] sm:$0xff] %vm722, %v705
        %727 = vst.msk [vmem:[#allocation2 + $0x20] sm:$0xff] %vm722, %v707
        %728 = vst.msk [vmem:[#allocation2 + $0x28] sm:$0xff] %vm722, %v709
        %729 = vst.msk [vmem:[#allocation2 + $0x30] sm:$0xff] %vm722, %v711
        %730 = vst.msk [vmem:[#allocation2 + $0x38] sm:$0xff] %vm722, %v713
        %s731 = sadd.s32 %s214, 1
        %s732 = smul.u32 %s731, 3
        %s733 = smul.addr %s732, 4
        %s734 = scalar_lea.vmem %s178, %s733 [#allocation3]
        %v735 = vld [vmem:[%s734] sm:$0xf]
        %v736 = vld [vmem:[%s734 + $0x4] sm:$0xf]
        %v737 = vld [vmem:[%s734 + $0xc] sm:$0xf]
        %v738 = vld [vmem:[%s734 + $0x10] sm:$0xf]
        %v739 = vld [vmem:[%s734 + $0x18] sm:$0xf]
        %v740 = vld [vmem:[%s734 + $0x1c] sm:$0xf]
        %v741 = vld [vmem:[%s734 + $0x24] sm:$0xf]
        %v742 = vld [vmem:[%s734 + $0x28] sm:$0xf]
        %v743 = vld [vmem:[%s734 + $0x30] sm:$0xf]
        %v744 = vld [vmem:[%s734 + $0x34] sm:$0xf]
        %v745 = vld [vmem:[%s734 + $0x3c] sm:$0xf]
        %v746 = vld [vmem:[%s734 + $0x40] sm:$0xf]
        %v747 = vld [vmem:[%s734 + $0x48] sm:$0xf]
        %v748 = vld [vmem:[%s734 + $0x4c] sm:$0xf]
        %v749 = vld [vmem:[%s734 + $0x54] sm:$0xf]
        %v750 = vld [vmem:[%s734 + $0x58] sm:$0xf]
        %v767 = vunpack.c.l.b16 %v735
        %v768 = vunpack.c.l.b16 %v736
        %v769 = vunpack.c.l.b16 %v737
        %v770 = vunpack.c.l.b16 %v738
        %v771 = vunpack.c.l.b16 %v739
        %v772 = vunpack.c.l.b16 %v740
        %v773 = vunpack.c.l.b16 %v741
        %v774 = vunpack.c.l.b16 %v742
        %v775 = vunpack.c.l.b16 %v743
        %v776 = vunpack.c.l.b16 %v744
        %v777 = vunpack.c.l.b16 %v745
        %v778 = vunpack.c.l.b16 %v746
        %v779 = vunpack.c.l.b16 %v747
        %v780 = vunpack.c.l.b16 %v748
        %v781 = vunpack.c.l.b16 %v749
        %v782 = vunpack.c.l.b16 %v750
        %v783 = vpack.c.b16 %v768, %v767
        %v784 = vpack.c.b16 %v770, %v769
        %v785 = vpack.c.b16 %v772, %v771
        %v786 = vpack.c.b16 %v774, %v773
        %v787 = vpack.c.b16 %v776, %v775
        %v788 = vpack.c.b16 %v778, %v777
        %v789 = vpack.c.b16 %v780, %v779
        %v790 = vpack.c.b16 %v782, %v781
        %791 = vrot.lane.b32.xlu0 %v783, 12
        %v792 = vpop.permute.xlu0 %791
        %793 = vrot.lane.b32.xlu0 %v784, 12
        %v794 = vpop.permute.xlu0 %793
        %795 = vrot.lane.b32.xlu0 %v785, 12
        %v796 = vpop.permute.xlu0 %795
        %797 = vrot.lane.b32.xlu0 %v786, 12
        %v798 = vpop.permute.xlu0 %797
        %799 = vrot.lane.b32.xlu0 %v787, 12
        %v800 = vpop.permute.xlu0 %799
        %801 = vrot.lane.b32.xlu0 %v788, 12
        %v802 = vpop.permute.xlu0 %801
        %803 = vrot.lane.b32.xlu0 %v789, 12
        %v804 = vpop.permute.xlu0 %803
        %805 = vrot.lane.b32.xlu0 %v790, 12
        %v806 = vpop.permute.xlu0 %805
        %vm815 = vcmask 130144
        %816 = vst.msk [vmem:[#allocation2] sm:$0xff] %vm815, %v792
        %817 = vst.msk [vmem:[#allocation2 + $0x8] sm:$0xff] %vm815, %v794
        %818 = vst.msk [vmem:[#allocation2 + $0x10] sm:$0xff] %vm815, %v796
        %819 = vst.msk [vmem:[#allocation2 + $0x18] sm:$0xff] %vm815, %v798
        %820 = vst.msk [vmem:[#allocation2 + $0x20] sm:$0xff] %vm815, %v800
        %821 = vst.msk [vmem:[#allocation2 + $0x28] sm:$0xff] %vm815, %v802
        %822 = vst.msk [vmem:[#allocation2 + $0x30] sm:$0xff] %vm815, %v804
        %823 = vst.msk [vmem:[#allocation2 + $0x38] sm:$0xff] %vm815, %v806
        %v824 = vld [vmem:[%s734] sm:$0xf]
        %v825 = vld [vmem:[%s734 + $0x4] sm:$0xf]
        %v826 = vld [vmem:[%s734 + $0x8] sm:$0x1]
        %v827 = vld [vmem:[%s734 + $0xc] sm:$0xf]
        %v828 = vld [vmem:[%s734 + $0x10] sm:$0xf]
        %v829 = vld [vmem:[%s734 + $0x14] sm:$0x1]
        %v830 = vld [vmem:[%s734 + $0x18] sm:$0xf]
        %v831 = vld [vmem:[%s734 + $0x1c] sm:$0xf]
        %v832 = vld [vmem:[%s734 + $0x20] sm:$0x1]
        %v833 = vld [vmem:[%s734 + $0x24] sm:$0xf]
        %v834 = vld [vmem:[%s734 + $0x28] sm:$0xf]
        %v835 = vld [vmem:[%s734 + $0x2c] sm:$0x1]
        %v836 = vld [vmem:[%s734 + $0x30] sm:$0xf]
        %v837 = vld [vmem:[%s734 + $0x34] sm:$0xf]
        %v838 = vld [vmem:[%s734 + $0x38] sm:$0x1]
        %v839 = vld [vmem:[%s734 + $0x3c] sm:$0xf]
        %v840 = vld [vmem:[%s734 + $0x40] sm:$0xf]
        %v841 = vld [vmem:[%s734 + $0x44] sm:$0x1]
        %v842 = vld [vmem:[%s734 + $0x48] sm:$0xf]
        %v843 = vld [vmem:[%s734 + $0x4c] sm:$0xf]
        %v844 = vld [vmem:[%s734 + $0x50] sm:$0x1]
        %v845 = vld [vmem:[%s734 + $0x54] sm:$0xf]
        %v846 = vld [vmem:[%s734 + $0x58] sm:$0xf]
        %v847 = vld [vmem:[%s734 + $0x5c] sm:$0x1]
        %v849 = vshrl.u32 %v824, 16
        %v851 = vrot.slane %v849, 4
        %v852 = vshll.u32 %v824, 16
        %v854 = vrot.slane %v852, 5
        %v855 = vor.u32 %v851, %v854
        %v856 = vrot.slane %v855, 4
        %v858 = vshll.u32 %v825, 16
        %v860 = vrot.slane %v858, 5
        %v861 = vsel %vm317, %v856, %v860
        %v862 = vshrl.u32 %v825, 16
        %v864 = vrot.slane %v862, 4
        %v865 = vor.u32 %v864, %v860
        %v866 = vrot.slane %v865, 4
        %v868 = vshll.u32 %v826, 16
        %v870 = vrot.slane %v868, 5
        %v871 = vsel %vm317, %v866, %v870
        %v873 = vshrl.u32 %v827, 16
        %v875 = vrot.slane %v873, 4
        %v876 = vshll.u32 %v827, 16
        %v878 = vrot.slane %v876, 5
        %v879 = vor.u32 %v875, %v878
        %v880 = vrot.slane %v879, 4
        %v882 = vshll.u32 %v828, 16
        %v884 = vrot.slane %v882, 5
        %v885 = vsel %vm317, %v880, %v884
        %v886 = vshrl.u32 %v828, 16
        %v888 = vrot.slane %v886, 4
        %v889 = vor.u32 %v888, %v884
        %v890 = vrot.slane %v889, 4
        %v892 = vshll.u32 %v829, 16
        %v894 = vrot.slane %v892, 5
        %v895 = vsel %vm317, %v890, %v894
        %v897 = vshrl.u32 %v830, 16
        %v899 = vrot.slane %v897, 4
        %v900 = vshll.u32 %v830, 16
        %v902 = vrot.slane %v900, 5
        %v903 = vor.u32 %v899, %v902
        %v904 = vrot.slane %v903, 4
        %v906 = vshll.u32 %v831, 16
        %v908 = vrot.slane %v906, 5
        %v909 = vsel %vm317, %v904, %v908
        %v910 = vshrl.u32 %v831, 16
        %v912 = vrot.slane %v910, 4
        %v913 = vor.u32 %v912, %v908
        %v914 = vrot.slane %v913, 4
        %v916 = vshll.u32 %v832, 16
        %v918 = vrot.slane %v916, 5
        %v919 = vsel %vm317, %v914, %v918
        %v921 = vshrl.u32 %v833, 16
        %v923 = vrot.slane %v921, 4
        %v924 = vshll.u32 %v833, 16
        %v926 = vrot.slane %v924, 5
        %v927 = vor.u32 %v923, %v926
        %v928 = vrot.slane %v927, 4
        %v930 = vshll.u32 %v834, 16
        %v932 = vrot.slane %v930, 5
        %v933 = vsel %vm317, %v928, %v932
        %v934 = vshrl.u32 %v834, 16
        %v936 = vrot.slane %v934, 4
        %v937 = vor.u32 %v936, %v932
        %v938 = vrot.slane %v937, 4
        %v940 = vshll.u32 %v835, 16
        %v942 = vrot.slane %v940, 5
        %v943 = vsel %vm317, %v938, %v942
        %v945 = vshrl.u32 %v836, 16
        %v947 = vrot.slane %v945, 4
        %v948 = vshll.u32 %v836, 16
        %v950 = vrot.slane %v948, 5
        %v951 = vor.u32 %v947, %v950
        %v952 = vrot.slane %v951, 4
        %v954 = vshll.u32 %v837, 16
        %v956 = vrot.slane %v954, 5
        %v957 = vsel %vm317, %v952, %v956
        %v958 = vshrl.u32 %v837, 16
        %v960 = vrot.slane %v958, 4
        %v961 = vor.u32 %v960, %v956
        %v962 = vrot.slane %v961, 4
        %v964 = vshll.u32 %v838, 16
        %v966 = vrot.slane %v964, 5
        %v967 = vsel %vm317, %v962, %v966
        %v969 = vshrl.u32 %v839, 16
        %v971 = vrot.slane %v969, 4
        %v972 = vshll.u32 %v839, 16
        %v974 = vrot.slane %v972, 5
        %v975 = vor.u32 %v971, %v974
        %v976 = vrot.slane %v975, 4
        %v978 = vshll.u32 %v840, 16
        %v980 = vrot.slane %v978, 5
        %v981 = vsel %vm317, %v976, %v980
        %v982 = vshrl.u32 %v840, 16
        %v984 = vrot.slane %v982, 4
        %v985 = vor.u32 %v984, %v980
        %v986 = vrot.slane %v985, 4
        %v988 = vshll.u32 %v841, 16
        %v990 = vrot.slane %v988, 5
        %v991 = vsel %vm317, %v986, %v990
        %v993 = vshrl.u32 %v842, 16
        %v995 = vrot.slane %v993, 4
        %v996 = vshll.u32 %v842, 16
        %v998 = vrot.slane %v996, 5
        %v999 = vor.u32 %v995, %v998
        %v1000 = vrot.slane %v999, 4
        %v1002 = vshll.u32 %v843, 16
        %v1004 = vrot.slane %v1002, 5
        %v1005 = vsel %vm317, %v1000, %v1004
        %v1006 = vshrl.u32 %v843, 16
        %v1008 = vrot.slane %v1006, 4
        %v1009 = vor.u32 %v1008, %v1004
        %v1010 = vrot.slane %v1009, 4
        %v1012 = vshll.u32 %v844, 16
        %v1014 = vrot.slane %v1012, 5
        %v1015 = vsel %vm317, %v1010, %v1014
        %v1017 = vshrl.u32 %v845, 16
        %v1019 = vrot.slane %v1017, 4
        %v1020 = vshll.u32 %v845, 16
        %v1022 = vrot.slane %v1020, 5
        %v1023 = vor.u32 %v1019, %v1022
        %v1024 = vrot.slane %v1023, 4
        %v1026 = vshll.u32 %v846, 16
        %v1028 = vrot.slane %v1026, 5
        %v1029 = vsel %vm317, %v1024, %v1028
        %v1030 = vshrl.u32 %v846, 16
        %v1032 = vrot.slane %v1030, 4
        %v1033 = vor.u32 %v1032, %v1028
        %v1034 = vrot.slane %v1033, 4
        %v1036 = vshll.u32 %v847, 16
        %v1038 = vrot.slane %v1036, 5
        %v1039 = vsel %vm317, %v1034, %v1038
        %v1040 = vunpack.c.l.b16 %v861
        %v1041 = vunpack.c.l.b16 %v871
        %v1042 = vunpack.c.l.b16 %v885
        %v1043 = vunpack.c.l.b16 %v895
        %v1044 = vunpack.c.l.b16 %v909
        %v1045 = vunpack.c.l.b16 %v919
        %v1046 = vunpack.c.l.b16 %v933
        %v1047 = vunpack.c.l.b16 %v943
        %v1048 = vunpack.c.l.b16 %v957
        %v1049 = vunpack.c.l.b16 %v967
        %v1050 = vunpack.c.l.b16 %v981
        %v1051 = vunpack.c.l.b16 %v991
        %v1052 = vunpack.c.l.b16 %v1005
        %v1053 = vunpack.c.l.b16 %v1015
        %v1054 = vunpack.c.l.b16 %v1029
        %v1055 = vunpack.c.l.b16 %v1039
        %v1056 = vpack.c.b16 %v1041, %v1040
        %v1057 = vpack.c.b16 %v1043, %v1042
        %v1058 = vpack.c.b16 %v1045, %v1044
        %v1059 = vpack.c.b16 %v1047, %v1046
        %v1060 = vpack.c.b16 %v1049, %v1048
        %v1061 = vpack.c.b16 %v1051, %v1050
        %v1062 = vpack.c.b16 %v1053, %v1052
        %v1063 = vpack.c.b16 %v1055, %v1054
        %1064 = vrot.lane.b32.xlu0 %v1056, 16
        %v1065 = vpop.permute.xlu0 %1064
        %1066 = vrot.lane.b32.xlu0 %v1057, 16
        %v1067 = vpop.permute.xlu0 %1066
        %1068 = vrot.lane.b32.xlu0 %v1058, 16
        %v1069 = vpop.permute.xlu0 %1068
        %1070 = vrot.lane.b32.xlu0 %v1059, 16
        %v1071 = vpop.permute.xlu0 %1070
        %1072 = vrot.lane.b32.xlu0 %v1060, 16
        %v1073 = vpop.permute.xlu0 %1072
        %1074 = vrot.lane.b32.xlu0 %v1061, 16
        %v1075 = vpop.permute.xlu0 %1074
        %1076 = vrot.lane.b32.xlu0 %v1062, 16
        %v1077 = vpop.permute.xlu0 %1076
        %1078 = vrot.lane.b32.xlu0 %v1063, 16
        %v1079 = vpop.permute.xlu0 %1078
        %vm1088 = vcmask 162944
        %1089 = vst.msk [vmem:[#allocation2] sm:$0xff] %vm1088, %v1065
        %1090 = vst.msk [vmem:[#allocation2 + $0x8] sm:$0xff] %vm1088, %v1067
        %1091 = vst.msk [vmem:[#allocation2 + $0x10] sm:$0xff] %vm1088, %v1069
        %1092 = vst.msk [vmem:[#allocation2 + $0x18] sm:$0xff] %vm1088, %v1071
        %1093 = vst.msk [vmem:[#allocation2 + $0x20] sm:$0xff] %vm1088, %v1073
        %1094 = vst.msk [vmem:[#allocation2 + $0x28] sm:$0xff] %vm1088, %v1075
        %1095 = vst.msk [vmem:[#allocation2 + $0x30] sm:$0xff] %vm1088, %v1077
        %1096 = vst.msk [vmem:[#allocation2 + $0x38] sm:$0xff] %vm1088, %v1079
        %v1097 = vld [vmem:[%s734] sm:$0xe]
        %v1098 = vld [vmem:[%s734 + $0x4] sm:$0xf]
        %v1099 = vld [vmem:[%s734 + $0x8] sm:$0x1]
        %v1100 = vld [vmem:[%s734 + $0xc] sm:$0xe]
        %v1101 = vld [vmem:[%s734 + $0x10] sm:$0xf]
        %v1102 = vld [vmem:[%s734 + $0x14] sm:$0x1]
        %v1103 = vld [vmem:[%s734 + $0x18] sm:$0xe]
        %v1104 = vld [vmem:[%s734 + $0x1c] sm:$0xf]
        %v1105 = vld [vmem:[%s734 + $0x20] sm:$0x1]
        %v1106 = vld [vmem:[%s734 + $0x24] sm:$0xe]
        %v1107 = vld [vmem:[%s734 + $0x28] sm:$0xf]
        %v1108 = vld [vmem:[%s734 + $0x2c] sm:$0x1]
        %v1109 = vld [vmem:[%s734 + $0x30] sm:$0xe]
        %v1110 = vld [vmem:[%s734 + $0x34] sm:$0xf]
        %v1111 = vld [vmem:[%s734 + $0x38] sm:$0x1]
        %v1112 = vld [vmem:[%s734 + $0x3c] sm:$0xe]
        %v1113 = vld [vmem:[%s734 + $0x40] sm:$0xf]
        %v1114 = vld [vmem:[%s734 + $0x44] sm:$0x1]
        %v1115 = vld [vmem:[%s734 + $0x48] sm:$0xe]
        %v1116 = vld [vmem:[%s734 + $0x4c] sm:$0xf]
        %v1117 = vld [vmem:[%s734 + $0x50] sm:$0x1]
        %v1118 = vld [vmem:[%s734 + $0x54] sm:$0xe]
        %v1119 = vld [vmem:[%s734 + $0x58] sm:$0xf]
        %v1120 = vld [vmem:[%s734 + $0x5c] sm:$0x1]
        %v1145 = vrot.slane %v1097, 5
        %v1146 = vrot.slane %v1145, 4
        %v1147 = vrot.slane %v1098, 5
        %v1148 = vsel %vm617, %v1146, %v1147
        %v1149 = vrot.slane %v1147, 4
        %v1150 = vrot.slane %v1099, 5
        %v1151 = vsel %vm617, %v1149, %v1150
        %v1152 = vrot.slane %v1100, 5
        %v1153 = vrot.slane %v1152, 4
        %v1154 = vrot.slane %v1101, 5
        %v1155 = vsel %vm617, %v1153, %v1154
        %v1156 = vrot.slane %v1154, 4
        %v1157 = vrot.slane %v1102, 5
        %v1158 = vsel %vm617, %v1156, %v1157
        %v1159 = vrot.slane %v1103, 5
        %v1160 = vrot.slane %v1159, 4
        %v1161 = vrot.slane %v1104, 5
        %v1162 = vsel %vm617, %v1160, %v1161
        %v1163 = vrot.slane %v1161, 4
        %v1164 = vrot.slane %v1105, 5
        %v1165 = vsel %vm617, %v1163, %v1164
        %v1166 = vrot.slane %v1106, 5
        %v1167 = vrot.slane %v1166, 4
        %v1168 = vrot.slane %v1107, 5
        %v1169 = vsel %vm617, %v1167, %v1168
        %v1170 = vrot.slane %v1168, 4
        %v1171 = vrot.slane %v1108, 5
        %v1172 = vsel %vm617, %v1170, %v1171
        %v1173 = vrot.slane %v1109, 5
        %v1174 = vrot.slane %v1173, 4
        %v1175 = vrot.slane %v1110, 5
        %v1176 = vsel %vm617, %v1174, %v1175
        %v1177 = vrot.slane %v1175, 4
        %v1178 = vrot.slane %v1111, 5
        %v1179 = vsel %vm617, %v1177, %v1178
        %v1180 = vrot.slane %v1112, 5
        %v1181 = vrot.slane %v1180, 4
        %v1182 = vrot.slane %v1113, 5
        %v1183 = vsel %vm617, %v1181, %v1182
        %v1184 = vrot.slane %v1182, 4
        %v1185 = vrot.slane %v1114, 5
        %v1186 = vsel %vm617, %v1184, %v1185
        %v1187 = vrot.slane %v1115, 5
        %v1188 = vrot.slane %v1187, 4
        %v1189 = vrot.slane %v1116, 5
        %v1190 = vsel %vm617, %v1188, %v1189
        %v1191 = vrot.slane %v1189, 4
        %v1192 = vrot.slane %v1117, 5
        %v1193 = vsel %vm617, %v1191, %v1192
        %v1194 = vrot.slane %v1118, 5
        %v1195 = vrot.slane %v1194, 4
        %v1196 = vrot.slane %v1119, 5
        %v1197 = vsel %vm617, %v1195, %v1196
        %v1198 = vrot.slane %v1196, 4
        %v1199 = vrot.slane %v1120, 5
        %v1200 = vsel %vm617, %v1198, %v1199
        %v1201 = vunpack.c.l.b16 %v1148
        %v1202 = vunpack.c.l.b16 %v1151
        %v1203 = vunpack.c.l.b16 %v1155
        %v1204 = vunpack.c.l.b16 %v1158
        %v1205 = vunpack.c.l.b16 %v1162
        %v1206 = vunpack.c.l.b16 %v1165
        %v1207 = vunpack.c.l.b16 %v1169
        %v1208 = vunpack.c.l.b16 %v1172
        %v1209 = vunpack.c.l.b16 %v1176
        %v1210 = vunpack.c.l.b16 %v1179
        %v1211 = vunpack.c.l.b16 %v1183
        %v1212 = vunpack.c.l.b16 %v1186
        %v1213 = vunpack.c.l.b16 %v1190
        %v1214 = vunpack.c.l.b16 %v1193
        %v1215 = vunpack.c.l.b16 %v1197
        %v1216 = vunpack.c.l.b16 %v1200
        %v1217 = vpack.c.b16 %v1202, %v1201
        %v1218 = vpack.c.b16 %v1204, %v1203
        %v1219 = vpack.c.b16 %v1206, %v1205
        %v1220 = vpack.c.b16 %v1208, %v1207
        %v1221 = vpack.c.b16 %v1210, %v1209
        %v1222 = vpack.c.b16 %v1212, %v1211
        %v1223 = vpack.c.b16 %v1214, %v1213
        %v1224 = vpack.c.b16 %v1216, %v1215
        %1225 = vrot.lane.b32.xlu0 %v1217, 20
        %v1226 = vpop.permute.xlu0 %1225
        %1227 = vrot.lane.b32.xlu0 %v1218, 20
        %v1228 = vpop.permute.xlu0 %1227
        %1229 = vrot.lane.b32.xlu0 %v1219, 20
        %v1230 = vpop.permute.xlu0 %1229
        %1231 = vrot.lane.b32.xlu0 %v1220, 20
        %v1232 = vpop.permute.xlu0 %1231
        %1233 = vrot.lane.b32.xlu0 %v1221, 20
        %v1234 = vpop.permute.xlu0 %1233
        %1235 = vrot.lane.b32.xlu0 %v1222, 20
        %v1236 = vpop.permute.xlu0 %1235
        %1237 = vrot.lane.b32.xlu0 %v1223, 20
        %v1238 = vpop.permute.xlu0 %1237
        %1239 = vrot.lane.b32.xlu0 %v1224, 20
        %v1240 = vpop.permute.xlu0 %1239
        %vm1249 = vcmask 195744
        %1250 = vst.msk [vmem:[#allocation2] sm:$0xff] %vm1249, %v1226
        %1251 = vst.msk [vmem:[#allocation2 + $0x8] sm:$0xff] %vm1249, %v1228
        %1252 = vst.msk [vmem:[#allocation2 + $0x10] sm:$0xff] %vm1249, %v1230
        %1253 = vst.msk [vmem:[#allocation2 + $0x18] sm:$0xff] %vm1249, %v1232
        %1254 = vst.msk [vmem:[#allocation2 + $0x20] sm:$0xff] %vm1249, %v1234
        %1255 = vst.msk [vmem:[#allocation2 + $0x28] sm:$0xff] %vm1249, %v1236
        %1256 = vst.msk [vmem:[#allocation2 + $0x30] sm:$0xff] %vm1249, %v1238
        %1257 = vst.msk [vmem:[#allocation2 + $0x38] sm:$0xff] %vm1249, %v1240
        %s1258 = sadd.s32 %s214, 2
        %s1259 = smul.u32 %s1258, 3
        %s1260 = smul.addr %s1259, 4
        %s1261 = scalar_lea.vmem %s178, %s1260 [#allocation3]
        %v1262 = vld [vmem:[%s1261] sm:$0xf]
        %v1263 = vld [vmem:[%s1261 + $0x4] sm:$0xf]
        %v1264 = vld [vmem:[%s1261 + $0xc] sm:$0xf]
        %v1265 = vld [vmem:[%s1261 + $0x10] sm:$0xf]
        %v1266 = vld [vmem:[%s1261 + $0x18] sm:$0xf]
        %v1267 = vld [vmem:[%s1261 + $0x1c] sm:$0xf]
        %v1268 = vld [vmem:[%s1261 + $0x24] sm:$0xf]
        %v1269 = vld [vmem:[%s1261 + $0x28] sm:$0xf]
        %v1270 = vld [vmem:[%s1261 + $0x30] sm:$0xf]
        %v1271 = vld [vmem:[%s1261 + $0x34] sm:$0xf]
        %v1272 = vld [vmem:[%s1261 + $0x3c] sm:$0xf]
        %v1273 = vld [vmem:[%s1261 + $0x40] sm:$0xf]
        %v1274 = vld [vmem:[%s1261 + $0x48] sm:$0xf]
        %v1275 = vld [vmem:[%s1261 + $0x4c] sm:$0xf]
        %v1276 = vld [vmem:[%s1261 + $0x54] sm:$0xf]
        %v1277 = vld [vmem:[%s1261 + $0x58] sm:$0xf]
        %v1294 = vunpack.c.l.b16 %v1262
        %v1295 = vunpack.c.l.b16 %v1263
        %v1296 = vunpack.c.l.b16 %v1264
        %v1297 = vunpack.c.l.b16 %v1265
        %v1298 = vunpack.c.l.b16 %v1266
        %v1299 = vunpack.c.l.b16 %v1267
        %v1300 = vunpack.c.l.b16 %v1268
        %v1301 = vunpack.c.l.b16 %v1269
        %v1302 = vunpack.c.l.b16 %v1270
        %v1303 = vunpack.c.l.b16 %v1271
        %v1304 = vunpack.c.l.b16 %v1272
        %v1305 = vunpack.c.l.b16 %v1273
        %v1306 = vunpack.c.l.b16 %v1274
        %v1307 = vunpack.c.l.b16 %v1275
        %v1308 = vunpack.c.l.b16 %v1276
        %v1309 = vunpack.c.l.b16 %v1277
        %v1310 = vpack.c.b16 %v1295, %v1294
        %v1311 = vpack.c.b16 %v1297, %v1296
        %v1312 = vpack.c.b16 %v1299, %v1298
        %v1313 = vpack.c.b16 %v1301, %v1300
        %v1314 = vpack.c.b16 %v1303, %v1302
        %v1315 = vpack.c.b16 %v1305, %v1304
        %v1316 = vpack.c.b16 %v1307, %v1306
        %v1317 = vpack.c.b16 %v1309, %v1308
        %1318 = vrot.lane.b32.xlu0 %v1310, 24
        %v1319 = vpop.permute.xlu0 %1318
        %1320 = vrot.lane.b32.xlu0 %v1311, 24
        %v1321 = vpop.permute.xlu0 %1320
        %1322 = vrot.lane.b32.xlu0 %v1312, 24
        %v1323 = vpop.permute.xlu0 %1322
        %1324 = vrot.lane.b32.xlu0 %v1313, 24
        %v1325 = vpop.permute.xlu0 %1324
        %1326 = vrot.lane.b32.xlu0 %v1314, 24
        %v1327 = vpop.permute.xlu0 %1326
        %1328 = vrot.lane.b32.xlu0 %v1315, 24
        %v1329 = vpop.permute.xlu0 %1328
        %1330 = vrot.lane.b32.xlu0 %v1316, 24
        %v1331 = vpop.permute.xlu0 %1330
        %1332 = vrot.lane.b32.xlu0 %v1317, 24
        %v1333 = vpop.permute.xlu0 %1332
        %vm1342 = vcmask 228544
        %1343 = vst.msk [vmem:[#allocation2] sm:$0xff] %vm1342, %v1319
        %1344 = vst.msk [vmem:[#allocation2 + $0x8] sm:$0xff] %vm1342, %v1321
        %1345 = vst.msk [vmem:[#allocation2 + $0x10] sm:$0xff] %vm1342, %v1323
        %1346 = vst.msk [vmem:[#allocation2 + $0x18] sm:$0xff] %vm1342, %v1325
        %1347 = vst.msk [vmem:[#allocation2 + $0x20] sm:$0xff] %vm1342, %v1327
        %1348 = vst.msk [vmem:[#allocation2 + $0x28] sm:$0xff] %vm1342, %v1329
        %1349 = vst.msk [vmem:[#allocation2 + $0x30] sm:$0xff] %vm1342, %v1331
        %1350 = vst.msk [vmem:[#allocation2 + $0x38] sm:$0xff] %vm1342, %v1333
        %v1351 = vld [vmem:[%s1261] sm:$0xf]
        %v1352 = vld [vmem:[%s1261 + $0x4] sm:$0xf]
        %v1353 = vld [vmem:[%s1261 + $0x8] sm:$0x1]
        %v1354 = vld [vmem:[%s1261 + $0xc] sm:$0xf]
        %v1355 = vld [vmem:[%s1261 + $0x10] sm:$0xf]
        %v1356 = vld [vmem:[%s1261 + $0x14] sm:$0x1]
        %v1357 = vld [vmem:[%s1261 + $0x18] sm:$0xf]
        %v1358 = vld [vmem:[%s1261 + $0x1c] sm:$0xf]
        %v1359 = vld [vmem:[%s1261 + $0x20] sm:$0x1]
        %v1360 = vld [vmem:[%s1261 + $0x24] sm:$0xf]
        %v1361 = vld [vmem:[%s1261 + $0x28] sm:$0xf]
        %v1362 = vld [vmem:[%s1261 + $0x2c] sm:$0x1]
        %v1363 = vld [vmem:[%s1261 + $0x30] sm:$0xf]
        %v1364 = vld [vmem:[%s1261 + $0x34] sm:$0xf]
        %v1365 = vld [vmem:[%s1261 + $0x38] sm:$0x1]
        %v1366 = vld [vmem:[%s1261 + $0x3c] sm:$0xf]
        %v1367 = vld [vmem:[%s1261 + $0x40] sm:$0xf]
        %v1368 = vld [vmem:[%s1261 + $0x44] sm:$0x1]
        %v1369 = vld [vmem:[%s1261 + $0x48] sm:$0xf]
        %v1370 = vld [vmem:[%s1261 + $0x4c] sm:$0xf]
        %v1371 = vld [vmem:[%s1261 + $0x50] sm:$0x1]
        %v1372 = vld [vmem:[%s1261 + $0x54] sm:$0xf]
        %v1373 = vld [vmem:[%s1261 + $0x58] sm:$0xf]
        %v1374 = vld [vmem:[%s1261 + $0x5c] sm:$0x1]
        %v1376 = vshrl.u32 %v1351, 16
        %v1378 = vrot.slane %v1376, 4
        %v1379 = vshll.u32 %v1351, 16
        %v1381 = vrot.slane %v1379, 5
        %v1382 = vor.u32 %v1378, %v1381
        %v1383 = vrot.slane %v1382, 4
        %v1385 = vshll.u32 %v1352, 16
        %v1387 = vrot.slane %v1385, 5
        %v1388 = vsel %vm317, %v1383, %v1387
        %v1389 = vshrl.u32 %v1352, 16
        %v1391 = vrot.slane %v1389, 4
        %v1392 = vor.u32 %v1391, %v1387
        %v1393 = vrot.slane %v1392, 4
        %v1395 = vshll.u32 %v1353, 16
        %v1397 = vrot.slane %v1395, 5
        %v1398 = vsel %vm317, %v1393, %v1397
        %v1400 = vshrl.u32 %v1354, 16
        %v1402 = vrot.slane %v1400, 4
        %v1403 = vshll.u32 %v1354, 16
        %v1405 = vrot.slane %v1403, 5
        %v1406 = vor.u32 %v1402, %v1405
        %v1407 = vrot.slane %v1406, 4
        %v1409 = vshll.u32 %v1355, 16
        %v1411 = vrot.slane %v1409, 5
        %v1412 = vsel %vm317, %v1407, %v1411
        %v1413 = vshrl.u32 %v1355, 16
        %v1415 = vrot.slane %v1413, 4
        %v1416 = vor.u32 %v1415, %v1411
        %v1417 = vrot.slane %v1416, 4
        %v1419 = vshll.u32 %v1356, 16
        %v1421 = vrot.slane %v1419, 5
        %v1422 = vsel %vm317, %v1417, %v1421
        %v1424 = vshrl.u32 %v1357, 16
        %v1426 = vrot.slane %v1424, 4
        %v1427 = vshll.u32 %v1357, 16
        %v1429 = vrot.slane %v1427, 5
        %v1430 = vor.u32 %v1426, %v1429
        %v1431 = vrot.slane %v1430, 4
        %v1433 = vshll.u32 %v1358, 16
        %v1435 = vrot.slane %v1433, 5
        %v1436 = vsel %vm317, %v1431, %v1435
        %v1437 = vshrl.u32 %v1358, 16
        %v1439 = vrot.slane %v1437, 4
        %v1440 = vor.u32 %v1439, %v1435
        %v1441 = vrot.slane %v1440, 4
        %v1443 = vshll.u32 %v1359, 16
        %v1445 = vrot.slane %v1443, 5
        %v1446 = vsel %vm317, %v1441, %v1445
        %v1448 = vshrl.u32 %v1360, 16
        %v1450 = vrot.slane %v1448, 4
        %v1451 = vshll.u32 %v1360, 16
        %v1453 = vrot.slane %v1451, 5
        %v1454 = vor.u32 %v1450, %v1453
        %v1455 = vrot.slane %v1454, 4
        %v1457 = vshll.u32 %v1361, 16
        %v1459 = vrot.slane %v1457, 5
        %v1460 = vsel %vm317, %v1455, %v1459
        %v1461 = vshrl.u32 %v1361, 16
        %v1463 = vrot.slane %v1461, 4
        %v1464 = vor.u32 %v1463, %v1459
        %v1465 = vrot.slane %v1464, 4
        %v1467 = vshll.u32 %v1362, 16
        %v1469 = vrot.slane %v1467, 5
        %v1470 = vsel %vm317, %v1465, %v1469
        %v1472 = vshrl.u32 %v1363, 16
        %v1474 = vrot.slane %v1472, 4
        %v1475 = vshll.u32 %v1363, 16
        %v1477 = vrot.slane %v1475, 5
        %v1478 = vor.u32 %v1474, %v1477
        %v1479 = vrot.slane %v1478, 4
        %v1481 = vshll.u32 %v1364, 16
        %v1483 = vrot.slane %v1481, 5
        %v1484 = vsel %vm317, %v1479, %v1483
        %v1485 = vshrl.u32 %v1364, 16
        %v1487 = vrot.slane %v1485, 4
        %v1488 = vor.u32 %v1487, %v1483
        %v1489 = vrot.slane %v1488, 4
        %v1491 = vshll.u32 %v1365, 16
        %v1493 = vrot.slane %v1491, 5
        %v1494 = vsel %vm317, %v1489, %v1493
        %v1496 = vshrl.u32 %v1366, 16
        %v1498 = vrot.slane %v1496, 4
        %v1499 = vshll.u32 %v1366, 16
        %v1501 = vrot.slane %v1499, 5
        %v1502 = vor.u32 %v1498, %v1501
        %v1503 = vrot.slane %v1502, 4
        %v1505 = vshll.u32 %v1367, 16
        %v1507 = vrot.slane %v1505, 5
        %v1508 = vsel %vm317, %v1503, %v1507
        %v1509 = vshrl.u32 %v1367, 16
        %v1511 = vrot.slane %v1509, 4
        %v1512 = vor.u32 %v1511, %v1507
        %v1513 = vrot.slane %v1512, 4
        %v1515 = vshll.u32 %v1368, 16
        %v1517 = vrot.slane %v1515, 5
        %v1518 = vsel %vm317, %v1513, %v1517
        %v1520 = vshrl.u32 %v1369, 16
        %v1522 = vrot.slane %v1520, 4
        %v1523 = vshll.u32 %v1369, 16
        %v1525 = vrot.slane %v1523, 5
        %v1526 = vor.u32 %v1522, %v1525
        %v1527 = vrot.slane %v1526, 4
        %v1529 = vshll.u32 %v1370, 16
        %v1531 = vrot.slane %v1529, 5
        %v1532 = vsel %vm317, %v1527, %v1531
        %v1533 = vshrl.u32 %v1370, 16
        %v1535 = vrot.slane %v1533, 4
        %v1536 = vor.u32 %v1535, %v1531
        %v1537 = vrot.slane %v1536, 4
        %v1539 = vshll.u32 %v1371, 16
        %v1541 = vrot.slane %v1539, 5
        %v1542 = vsel %vm317, %v1537, %v1541
        %v1544 = vshrl.u32 %v1372, 16
        %v1546 = vrot.slane %v1544, 4
        %v1547 = vshll.u32 %v1372, 16
        %v1549 = vrot.slane %v1547, 5
        %v1550 = vor.u32 %v1546, %v1549
        %v1551 = vrot.slane %v1550, 4
        %v1553 = vshll.u32 %v1373, 16
        %v1555 = vrot.slane %v1553, 5
        %v1556 = vsel %vm317, %v1551, %v1555
        %v1557 = vshrl.u32 %v1373, 16
        %v1559 = vrot.slane %v1557, 4
        %v1560 = vor.u32 %v1559, %v1555
        %v1561 = vrot.slane %v1560, 4
        %v1563 = vshll.u32 %v1374, 16
        %v1565 = vrot.slane %v1563, 5
        %v1566 = vsel %vm317, %v1561, %v1565
        %v1567 = vunpack.c.l.b16 %v1388
        %v1568 = vunpack.c.l.b16 %v1398
        %v1569 = vunpack.c.l.b16 %v1412
        %v1570 = vunpack.c.l.b16 %v1422
        %v1571 = vunpack.c.l.b16 %v1436
        %v1572 = vunpack.c.l.b16 %v1446
        %v1573 = vunpack.c.l.b16 %v1460
        %v1574 = vunpack.c.l.b16 %v1470
        %v1575 = vunpack.c.l.b16 %v1484
        %v1576 = vunpack.c.l.b16 %v1494
        %v1577 = vunpack.c.l.b16 %v1508
        %v1578 = vunpack.c.l.b16 %v1518
        %v1579 = vunpack.c.l.b16 %v1532
        %v1580 = vunpack.c.l.b16 %v1542
        %v1581 = vunpack.c.l.b16 %v1556
        %v1582 = vunpack.c.l.b16 %v1566
        %v1583 = vpack.c.b16 %v1568, %v1567
        %v1584 = vpack.c.b16 %v1570, %v1569
        %v1585 = vpack.c.b16 %v1572, %v1571
        %v1586 = vpack.c.b16 %v1574, %v1573
        %v1587 = vpack.c.b16 %v1576, %v1575
        %v1588 = vpack.c.b16 %v1578, %v1577
        %v1589 = vpack.c.b16 %v1580, %v1579
        %v1590 = vpack.c.b16 %v1582, %v1581
        %1591 = vrot.lane.b32.xlu0 %v1583, 28
        %v1592 = vpop.permute.xlu0 %1591
        %1593 = vrot.lane.b32.xlu0 %v1584, 28
        %v1594 = vpop.permute.xlu0 %1593
        %1595 = vrot.lane.b32.xlu0 %v1585, 28
        %v1596 = vpop.permute.xlu0 %1595
        %1597 = vrot.lane.b32.xlu0 %v1586, 28
        %v1598 = vpop.permute.xlu0 %1597
        %1599 = vrot.lane.b32.xlu0 %v1587, 28
        %v1600 = vpop.permute.xlu0 %1599
        %1601 = vrot.lane.b32.xlu0 %v1588, 28
        %v1602 = vpop.permute.xlu0 %1601
        %1603 = vrot.lane.b32.xlu0 %v1589, 28
        %v1604 = vpop.permute.xlu0 %1603
        %1605 = vrot.lane.b32.xlu0 %v1590, 28
        %v1606 = vpop.permute.xlu0 %1605
        %vm1615 = vcmask 261344
        %1616 = vst.msk [vmem:[#allocation2] sm:$0xff] %vm1615, %v1592
        %1617 = vst.msk [vmem:[#allocation2 + $0x8] sm:$0xff] %vm1615, %v1594
        %1618 = vst.msk [vmem:[#allocation2 + $0x10] sm:$0xff] %vm1615, %v1596
        %1619 = vst.msk [vmem:[#allocation2 + $0x18] sm:$0xff] %vm1615, %v1598
        %1620 = vst.msk [vmem:[#allocation2 + $0x20] sm:$0xff] %vm1615, %v1600
        %1621 = vst.msk [vmem:[#allocation2 + $0x28] sm:$0xff] %vm1615, %v1602
        %1622 = vst.msk [vmem:[#allocation2 + $0x30] sm:$0xff] %vm1615, %v1604
        %1623 = vst.msk [vmem:[#allocation2 + $0x38] sm:$0xff] %vm1615, %v1606
        %v1624 = vld [vmem:[%s1261] sm:$0xe]
        %v1625 = vld [vmem:[%s1261 + $0x4] sm:$0xf]
        %v1626 = vld [vmem:[%s1261 + $0x8] sm:$0x1]
        %v1627 = vld [vmem:[%s1261 + $0xc] sm:$0xe]
        %v1628 = vld [vmem:[%s1261 + $0x10] sm:$0xf]
        %v1629 = vld [vmem:[%s1261 + $0x14] sm:$0x1]
        %v1630 = vld [vmem:[%s1261 + $0x18] sm:$0xe]
        %v1631 = vld [vmem:[%s1261 + $0x1c] sm:$0xf]
        %v1632 = vld [vmem:[%s1261 + $0x20] sm:$0x1]
        %v1633 = vld [vmem:[%s1261 + $0x24] sm:$0xe]
        %v1634 = vld [vmem:[%s1261 + $0x28] sm:$0xf]
        %v1635 = vld [vmem:[%s1261 + $0x2c] sm:$0x1]
        %v1636 = vld [vmem:[%s1261 + $0x30] sm:$0xe]
        %v1637 = vld [vmem:[%s1261 + $0x34] sm:$0xf]
        %v1638 = vld [vmem:[%s1261 + $0x38] sm:$0x1]
        %v1639 = vld [vmem:[%s1261 + $0x3c] sm:$0xe]
        %v1640 = vld [vmem:[%s1261 + $0x40] sm:$0xf]
        %v1641 = vld [vmem:[%s1261 + $0x44] sm:$0x1]
        %v1642 = vld [vmem:[%s1261 + $0x48] sm:$0xe]
        %v1643 = vld [vmem:[%s1261 + $0x4c] sm:$0xf]
        %v1644 = vld [vmem:[%s1261 + $0x50] sm:$0x1]
        %v1645 = vld [vmem:[%s1261 + $0x54] sm:$0xe]
        %v1646 = vld [vmem:[%s1261 + $0x58] sm:$0xf]
        %v1647 = vld [vmem:[%s1261 + $0x5c] sm:$0x1]
        %v1672 = vrot.slane %v1624, 5
        %v1673 = vrot.slane %v1672, 4
        %v1674 = vrot.slane %v1625, 5
        %v1675 = vsel %vm617, %v1673, %v1674
        %v1676 = vrot.slane %v1674, 4
        %v1677 = vrot.slane %v1626, 5
        %v1678 = vsel %vm617, %v1676, %v1677
        %v1679 = vrot.slane %v1627, 5
        %v1680 = vrot.slane %v1679, 4
        %v1681 = vrot.slane %v1628, 5
        %v1682 = vsel %vm617, %v1680, %v1681
        %v1683 = vrot.slane %v1681, 4
        %v1684 = vrot.slane %v1629, 5
        %v1685 = vsel %vm617, %v1683, %v1684
        %v1686 = vrot.slane %v1630, 5
        %v1687 = vrot.slane %v1686, 4
        %v1688 = vrot.slane %v1631, 5
        %v1689 = vsel %vm617, %v1687, %v1688
        %v1690 = vrot.slane %v1688, 4
        %v1691 = vrot.slane %v1632, 5
        %v1692 = vsel %vm617, %v1690, %v1691
        %v1693 = vrot.slane %v1633, 5
        %v1694 = vrot.slane %v1693, 4
        %v1695 = vrot.slane %v1634, 5
        %v1696 = vsel %vm617, %v1694, %v1695
        %v1697 = vrot.slane %v1695, 4
        %v1698 = vrot.slane %v1635, 5
        %v1699 = vsel %vm617, %v1697, %v1698
        %v1700 = vrot.slane %v1636, 5
        %v1701 = vrot.slane %v1700, 4
        %v1702 = vrot.slane %v1637, 5
        %v1703 = vsel %vm617, %v1701, %v1702
        %v1704 = vrot.slane %v1702, 4
        %v1705 = vrot.slane %v1638, 5
        %v1706 = vsel %vm617, %v1704, %v1705
        %v1707 = vrot.slane %v1639, 5
        %v1708 = vrot.slane %v1707, 4
        %v1709 = vrot.slane %v1640, 5
        %v1710 = vsel %vm617, %v1708, %v1709
        %v1711 = vrot.slane %v1709, 4
        %v1712 = vrot.slane %v1641, 5
        %v1713 = vsel %vm617, %v1711, %v1712
        %v1714 = vrot.slane %v1642, 5
        %v1715 = vrot.slane %v1714, 4
        %v1716 = vrot.slane %v1643, 5
        %v1717 = vsel %vm617, %v1715, %v1716
        %v1718 = vrot.slane %v1716, 4
        %v1719 = vrot.slane %v1644, 5
        %v1720 = vsel %vm617, %v1718, %v1719
        %v1721 = vrot.slane %v1645, 5
        %v1722 = vrot.slane %v1721, 4
        %v1723 = vrot.slane %v1646, 5
        %v1724 = vsel %vm617, %v1722, %v1723
        %v1725 = vrot.slane %v1723, 4
        %v1726 = vrot.slane %v1647, 5
        %v1727 = vsel %vm617, %v1725, %v1726
        %v1728 = vunpack.c.l.b16 %v1675
        %v1729 = vunpack.c.l.b16 %v1678
        %v1730 = vunpack.c.l.b16 %v1682
        %v1731 = vunpack.c.l.b16 %v1685
        %v1732 = vunpack.c.l.b16 %v1689
        %v1733 = vunpack.c.l.b16 %v1692
        %v1734 = vunpack.c.l.b16 %v1696
        %v1735 = vunpack.c.l.b16 %v1699
        %v1736 = vunpack.c.l.b16 %v1703
        %v1737 = vunpack.c.l.b16 %v1706
        %v1738 = vunpack.c.l.b16 %v1710
        %v1739 = vunpack.c.l.b16 %v1713
        %v1740 = vunpack.c.l.b16 %v1717
        %v1741 = vunpack.c.l.b16 %v1720
        %v1742 = vunpack.c.l.b16 %v1724
        %v1743 = vunpack.c.l.b16 %v1727
        %v1744 = vpack.c.b16 %v1729, %v1728
        %v1745 = vpack.c.b16 %v1731, %v1730
        %v1746 = vpack.c.b16 %v1733, %v1732
        %v1747 = vpack.c.b16 %v1735, %v1734
        %v1748 = vpack.c.b16 %v1737, %v1736
        %v1749 = vpack.c.b16 %v1739, %v1738
        %v1750 = vpack.c.b16 %v1741, %v1740
        %v1751 = vpack.c.b16 %v1743, %v1742
        %1752 = vrot.lane.b32.xlu0 %v1744, 32
        %v1753 = vpop.permute.xlu0 %1752
        %1754 = vrot.lane.b32.xlu0 %v1745, 32
        %v1755 = vpop.permute.xlu0 %1754
        %1756 = vrot.lane.b32.xlu0 %v1746, 32
        %v1757 = vpop.permute.xlu0 %1756
        %1758 = vrot.lane.b32.xlu0 %v1747, 32
        %v1759 = vpop.permute.xlu0 %1758
        %1760 = vrot.lane.b32.xlu0 %v1748, 32
        %v1761 = vpop.permute.xlu0 %1760
        %1762 = vrot.lane.b32.xlu0 %v1749, 32
        %v1763 = vpop.permute.xlu0 %1762
        %1764 = vrot.lane.b32.xlu0 %v1750, 32
        %v1765 = vpop.permute.xlu0 %1764
        %1766 = vrot.lane.b32.xlu0 %v1751, 32
        %v1767 = vpop.permute.xlu0 %1766
        %vm1776 = vcmask 294144
        %1777 = vst.msk [vmem:[#allocation2] sm:$0xff] %vm1776, %v1753
        %1778 = vst.msk [vmem:[#allocation2 + $0x8] sm:$0xff] %vm1776, %v1755
        %1779 = vst.msk [vmem:[#allocation2 + $0x10] sm:$0xff] %vm1776, %v1757
        %1780 = vst.msk [vmem:[#allocation2 + $0x18] sm:$0xff] %vm1776, %v1759
        %1781 = vst.msk [vmem:[#allocation2 + $0x20] sm:$0xff] %vm1776, %v1761
        %1782 = vst.msk [vmem:[#allocation2 + $0x28] sm:$0xff] %vm1776, %v1763
        %1783 = vst.msk [vmem:[#allocation2 + $0x30] sm:$0xff] %vm1776, %v1765
        %1784 = vst.msk [vmem:[#allocation2 + $0x38] sm:$0xff] %vm1776, %v1767
        %v1785 = vld [vmem:[%s187] sm:$0xf]
        %v1786 = vld [vmem:[#allocation2] sm:$0xff]
        %v1787 = vld [vmem:[#allocation2 + $0x8] sm:$0xff]
        %v1788 = vld [vmem:[#allocation2 + $0x10] sm:$0xff]
        %v1789 = vld [vmem:[#allocation2 + $0x18] sm:$0xff]
        %v1790 = vld [vmem:[#allocation2 + $0x20] sm:$0xff]
        %v1791 = vld [vmem:[#allocation2 + $0x28] sm:$0xff]
        %v1792 = vld [vmem:[#allocation2 + $0x30] sm:$0xff]
        %v1793 = vld [vmem:[#allocation2 + $0x38] sm:$0xff]
        %vm1794 = vcmask 293888
        %v1796 = vsel %vm1794, %v1785, 0
        %v1799 = vsel %vm1794, %v1786, 0
        %v1802 = vsel %vm1794, %v1787, 0
        %v1805 = vsel %vm1794, %v1788, 0
        %v1808 = vsel %vm1794, %v1789, 0
        %v1811 = vsel %vm1794, %v1790, 0
        %v1814 = vsel %vm1794, %v1791, 0
        %v1817 = vsel %vm1794, %v1792, 0
        %v1820 = vsel %vm1794, %v1793, 0
        %1822 = vmatprep.subr.bf16.mxu0 0
        %1823 = vmatpush1.bf16.xpose.msra.mxu0 %v1799
        %1824 = vmatprep.subr.bf16.mxu0 0
        %1825 = vmatpush1.bf16.xpose.msra.mxu0 %v1802
        %1826 = vmatprep.subr.bf16.mxu0 0
        %1827 = vmatpush1.bf16.xpose.msra.mxu0 %v1805
        %1828 = vmatprep.subr.bf16.mxu0 0
        %1829 = vmatpush1.bf16.xpose.msra.mxu0 %v1808
        %1830 = vmatprep.subr.bf16.mxu0 0
        %1831 = vmatpush1.bf16.xpose.msra.mxu0 %v1811
        %1832 = vmatprep.subr.bf16.mxu0 0
        %1833 = vmatpush1.bf16.xpose.msra.mxu0 %v1814
        %1834 = vmatprep.subr.bf16.mxu0 0
        %1835 = vmatpush1.bf16.xpose.msra.mxu0 %v1817
        %1836 = vmatprep.subr.bf16.mxu0 0
        %1837 = vmatpush1.bf16.xpose.msra.mxu0 %v1820
        %1838 = vmatprep.subr.bf16.mxu0 0
        %1839 = vmatpush1.bf16.xpose.msra.mxu0 0
        %1840 = vmatprep.subr.bf16.mxu0 0
        %1841 = vmatpush1.bf16.xpose.msra.mxu0 0
        %1842 = vmatprep.subr.bf16.mxu0 0
        %1843 = vmatpush1.bf16.xpose.msra.mxu0 0
        %1844 = vmatprep.subr.bf16.mxu0 0
        %1845 = vmatpush1.bf16.xpose.msra.mxu0 0
        %1846 = vmatprep.subr.bf16.mxu0 0
        %1847 = vmatpush1.bf16.xpose.msra.mxu0 0
        %1848 = vmatprep.subr.bf16.mxu0 0
        %1849 = vmatpush1.bf16.xpose.msra.mxu0 0
        %1850 = vmatprep.subr.bf16.mxu0 0
        %1851 = vmatpush1.bf16.xpose.msra.mxu0 0
        %1852 = vmatprep.subr.bf16.mxu0 0
        %1853 = vmatpush1.bf16.xpose.msra.mxu0 0
        %1854 = vmatprep.mubr.bf16.mxu0 0
        %1855 = vmatmul.mubr.bf16.gmra.mrb[0].mxu0 %v1796
        %v1856 = vpop.f32.mrb[0].mxu0
        %v1857 = vadd.f32 0.0, %v1856
        %v1858 = vpop.f32.mrb[0].mxu0
        %v1859 = vpop.f32.mrb[0].mxu0
        %v1860 = vpop.f32.mrb[0].mxu0
        %1861 = vdwg.mxu0
        %1862 = vst [vmem:[%s212] sm:$0xff] %v1857
        %s1863 = sand.u32 %s96, 1
        %s1864 = scalar_lea.sflag [#allocation5], %s1863
        %s1865 = sand.u32 %s96, 1
        %s1866 = smul.addr %s1865, 8
        %s1867 = scalar_lea.vmem [#allocation8], %s1866
        // Predicated region
        $region37: #{adaptive_rotated_scaled_conv2d.3} parent=27 // pred_check
          %p1868 = pneg %p106
        $region38: #{adaptive_rotated_scaled_conv2d.3} parent=27 // pred_check_branch
          %1870 = sbr.rel (%p1868) target = $region40
        $region39: #{adaptive_rotated_scaled_conv2d.3} parent=27 // pred_region
          %s1872 = ssub.s32 128, 128
          %1873 = vsyncadd %s1864, %s1872
          %s1874 = smul.addr %s26, 2
          %s1875 = sadd.s32 %s27, %s1874
          %s1876 = smul.addr %s1875, 128
          %s1877 = scalar_lea.hbm %s2, %s1876
          %s1879 = sshll.u32 %s1867, 4
          %s1880 = int_to_ptr.vmem [resolvable:$true] %s1879
          %1882 = dma.vmem_to_hbm [thread:$0]  %s1880, 128, %s1877, %s1864
        $region40: #{adaptive_rotated_scaled_conv2d.3} parent=27 // pred_fallthru
          _
      $region28: #{adaptive_rotated_scaled_conv2d.3} parent=5 // pred_fallthru
        _
      %p1883 = scmp.le.s32.totalorder 2, %s17
      // Predicated region
      $region41: #{adaptive_rotated_scaled_conv2d.3} parent=5 // pred_check
        %p1884 = pneg %p1883
      $region42: #{adaptive_rotated_scaled_conv2d.3} parent=5 // pred_check_branch
        %1886 = sbr.rel (%p1884) target = $region44
      $region43: #{adaptive_rotated_scaled_conv2d.3} parent=5 // pred_region
        %s1887 = ssub.s32 %s17, 2
        // Predicated region
        $region45: #{adaptive_rotated_scaled_conv2d.3} parent=43 // pred_check
          %p1888 = pneg %p112
        $region46: #{adaptive_rotated_scaled_conv2d.3} parent=43 // pred_check_branch
          %1890 = sbr.rel (%p1888) target = $region48
        $region47: #{adaptive_rotated_scaled_conv2d.3} parent=43 // pred_region
          %s1891 = sand.u32 %s97, 1
          %s1892 = scalar_lea.sflag [#allocation5], %s1891
          %s1893 = sand.u32 %s97, 1
          %s1894 = smul.addr %s1893, 8
          %s1895 = scalar_lea.vmem [#allocation8], %s1894
          %1896 = dma.done %s1892, 128
        $region48: #{adaptive_rotated_scaled_conv2d.3} parent=43 // pred_fallthru
          _
      $region44: #{adaptive_rotated_scaled_conv2d.3} parent=5 // pred_fallthru
        _
    $region6: #{adaptive_rotated_scaled_conv2d.3} parent=1 // loop_footer
      %s21 = sadd.s32 1, %s17
    $region7: #{adaptive_rotated_scaled_conv2d.3} parent=1 // loop_footer_branch
      %16 = sbr.rel target = $region3
    $region8: #{adaptive_rotated_scaled_conv2d.3} parent=1 // loop_exit
      _
    %1897 = vsyncpa [#allocation4], 1
    %s1898 = scalar_lea.sflag [#allocation4], 1
    %1899 = vsyncpa %s1898, 1
    %1900 = vsyncpa [#allocation7], 1
    %s1901 = scalar_lea.sflag [#allocation7], 1
    %1902 = vsyncpa %s1901, 1
    %1903 = vsyncpa [#allocation5], 1
    %s1904 = scalar_lea.sflag [#allocation5], 1
    %1905 = vsyncpa %s1904, 1

</llo_original>
